<compile_context>
chip_gen: v5e
topology: v5e:2x2
jax: 0.10.0
libtpu: 0.0.40
codegen_flags: <defaults>
</compile_context>

<pallas_src>
import functools

import jax
import jax.numpy as jnp
import numpy as np
from jax import lax
from jax.experimental import pallas as pl
from jax.experimental.pallas import tpu as pltpu

C_IN = 3
C_HID = 64
C_OUT = 3
KH = KW = 4
STRIDE = 2
PAD = 1
NUM_TAPS = KH * KW
COUT_PAD = 128     # lane-dense output channels (3 real + 125 zero)
B_BLK = 2          # images folded into one grid step (batch into matmul M)
N_ACC = 4          # independent accumulators for the tap loop


# ----------------------------------------------------------------------------
# Fused Pallas kernel: conv1 (im2col matmul) + ReLU + conv2 (one big gather
# matmul + per-tap weight matmuls) + Tanh.  One grid step = B_BLK images.
# ----------------------------------------------------------------------------
def _fused_generator_kernel(p_ref, w1_ref, b1_ref, s_ref, w2_ref, b2_ref,
                            o_ref, *, num_taps, n_acc):
    # p_ref : (1, B*M1, K1P)        bf16 im2col patches (batch folded into M)
    # w1_ref: (K1P, C_HID)          bf16 (zero rows for the K padding)
    # b1_ref: (1, C_HID)            f32
    # s_ref : (B*TAPS*M2, B*M1)     bf16 constant 0/1 gather matrix
    # w2_ref: (TAPS, C_HID, COUT_PAD) bf16 (zero cols for the Cout padding)
    # b2_ref: (1, COUT_PAD)         f32
    # o_ref : (1, B*M2, COUT_PAD)   f32

    # ---- conv1 + ReLU; intermediate h never leaves VMEM/vregs ----
    h = jnp.dot(p_ref[0], w1_ref[...], preferred_element_type=jnp.float32)
    h = jnp.maximum(h + b1_ref[...], 0.0).astype(jnp.bfloat16)   # (B*M1, C_HID)

    # ---- conv2 im2col gather for ALL taps & images in ONE matmul ----
    # Each row of g is an exact copy of one h row (or zero for the padding
    # ring); rows are ordered (tap, batch, out_pos).
    g = jnp.dot(s_ref[...], h, preferred_element_type=jnp.float32)
    g = g.astype(jnp.bfloat16)                                    # exact cast

    bm2, cout = o_ref.shape[1], o_ref.shape[2]
    accs = [jnp.zeros((bm2, cout), jnp.float32) for _ in range(n_acc)]
    for t in range(num_taps):                                     # unrolled
        g_t = g[t * bm2:(t + 1) * bm2, :]     # contiguous, 8-row-aligned slice
        accs[t % n_acc] = accs[t % n_acc] + jnp.dot(
            g_t, w2_ref[t], preferred_element_type=jnp.float32)

    # pairwise tree reduction of the independent accumulators
    while len(accs) > 1:
        nxt = [accs[i] + accs[i + 1] for i in range(0, len(accs) - 1, 2)]
        if len(accs) % 2:
            nxt.append(accs[-1])
        accs = nxt

    o_ref[0] = jnp.tanh(accs[0] + b2_ref[...])      # lane-dense (B*M2,128) store


# ----------------------------------------------------------------------------
# Wrapper glue (tiny, fused by XLA under jit)
# ----------------------------------------------------------------------------
def _im2col(x_nchw, kh, kw, stride, pad):
    """NCHW input -> (N, OH*OW, KH*KW*C) patches, tap-major / channel-minor."""
    n, c, h, w = x_nchw.shape
    oh = (h + 2 * pad - kh) // stride + 1
    ow = (w + 2 * pad - kw) // stride + 1
    xh = jnp.transpose(x_nchw, (0, 2, 3, 1))                      # NHWC
    xp = jnp.pad(xh, ((0, 0), (pad, pad), (pad, pad), (0, 0)))
    taps = []
    for ki in range(kh):
        for kj in range(kw):
            taps.append(xp[:, ki:ki + stride * oh:stride,
                           kj:kj + stride * ow:stride, :])        # (N,OH,OW,C)
    patches = jnp.concatenate(taps, axis=-1)                      # (N,OH,OW,KH*KW*C)
    return patches.reshape(n, oh * ow, kh * kw * c), oh, ow


def _build_selection(oh1, ow1, oh2, ow2, kh, kw, stride, pad, b_blk):
    """Constant 0/1 gather matrix for a batch block.

    Rows ordered (tap, batch, out_pos), columns ordered (batch, in_pos):
    (S_big @ h)[(t*B + b)*M2 + m, :] = h[b*M1 + row(t, m), :] or 0 (padding).
    """
    m1, m2 = oh1 * ow1, oh2 * ow2
    sel = np.zeros((kh * kw, m2, m1), np.float32)
    for ki in range(kh):
        for kj in range(kw):
            t = ki * kw + kj
            for oy in range(oh2):
                for ox in range(ow2):
                    iy = stride * oy + ki - pad
                    ix = stride * ox + kj - pad
                    if 0 <= iy < oh1 and 0 <= ix < ow1:
                        sel[t, oy * ow2 + ox, iy * ow1 + ix] = 1.0
    big = np.zeros((kh * kw, b_blk, m2, b_blk, m1), np.float32)
    for b in range(b_blk):
        big[:, b, :, b, :] = sel
    return jnp.asarray(big.reshape(kh * kw * b_blk * m2, b_blk * m1))


def generator_forward(x, params, *, b_blk=B_BLK):
    n, c, _, _ = x.shape
    patches, oh1, ow1 = _im2col(x, KH, KW, STRIDE, PAD)           # (N, 64, 48)
    m1 = oh1 * ow1
    oh2 = (oh1 + 2 * PAD - KH) // STRIDE + 1
    ow2 = (ow1 + 2 * PAD - KW) // STRIDE + 1
    m2 = oh2 * ow2
    k1 = c * KH * KW
    k1p = ((k1 + 127) // 128) * 128                               # lane-dense K

    b_blk = min(b_blk, max(n, 1))
    n_pad = ((n + b_blk - 1) // b_blk) * b_blk
    nblk = n_pad // b_blk
    bm1, bm2, btm = b_blk * m1, b_blk * m2, b_blk * NUM_TAPS * m2

    # patches: pad K 48->128, fold batch block into M, cast to bf16
    patches = jnp.pad(patches, ((0, n_pad - n), (0, 0), (0, k1p - k1)))
    patches = patches.reshape(nblk, bm1, k1p).astype(jnp.bfloat16)

    # conv1 weight: (Cout,Cin,KH,KW) -> (KH*KW*Cin, C_HID), zero-padded K rows
    w1m = params["w1"].transpose(2, 3, 1, 0).reshape(k1, C_HID)
    w1m = jnp.pad(w1m, ((0, k1p - k1), (0, 0))).astype(jnp.bfloat16)
    b1r = params["b1"].reshape(1, C_HID).astype(jnp.float32)

    # conv2 weight: per-tap (C_HID, Cout), Cout padded 3 -> 128
    w2t = params["w2"].transpose(2, 3, 1, 0).reshape(NUM_TAPS, C_HID, C_OUT)
    w2t = jnp.pad(w2t, ((0, 0), (0, 0), (0, COUT_PAD - C_OUT))).astype(jnp.bfloat16)
    b2r = jnp.pad(params["b2"], (0, COUT_PAD - C_OUT)).reshape(1, COUT_PAD)
    b2r = b2r.astype(jnp.float32)

    sel = _build_selection(oh1, ow1, oh2, ow2, KH, KW, STRIDE, PAD,
                           b_blk).astype(jnp.bfloat16)

    flops = 2 * nblk * (bm1 * k1p * C_HID + btm * bm1 * C_HID
                        + NUM_TAPS * bm2 * C_HID * COUT_PAD)
    bytes_accessed = (2 * (patches.size + w1m.size + sel.size + w2t.size)
                      + 4 * (b1r.size + b2r.size + nblk * bm2 * COUT_PAD))

    out = pl.pallas_call(
        functools.partial(_fused_generator_kernel,
                          num_taps=NUM_TAPS, n_acc=N_ACC),
        out_shape=jax.ShapeDtypeStruct((nblk, bm2, COUT_PAD), jnp.float32),
        grid=(nblk,),
        in_specs=[
            pl.BlockSpec((1, bm1, k1p), lambda i: (i, 0, 0)),
            pl.BlockSpec((k1p, C_HID), lambda i: (0, 0)),
            pl.BlockSpec((1, C_HID), lambda i: (0, 0)),
            pl.BlockSpec((btm, bm1), lambda i: (0, 0)),
            pl.BlockSpec((NUM_TAPS, C_HID, COUT_PAD), lambda i: (0, 0, 0)),
            pl.BlockSpec((1, COUT_PAD), lambda i: (0, 0)),
        ],
        out_specs=pl.BlockSpec((1, bm2, COUT_PAD), lambda i: (i, 0, 0)),
        compiler_params=pltpu.CompilerParams(
            dimension_semantics=("parallel",)),
        cost_estimate=pl.CostEstimate(
            flops=flops,
            transcendentals=nblk * bm2 * COUT_PAD,
            bytes_accessed=bytes_accessed),
    )(patches, w1m, b1r, sel, w2t, b2r)

    # unfold batch block, slice real channels, back to NCHW (tiny)
    out = out.reshape(n_pad, m2, COUT_PAD)[:n, :, :C_OUT]
    return out.reshape(n, oh2, ow2, C_OUT).transpose(0, 3, 1, 2)


# ----------------------------------------------------------------------------
# Parameter init (PyTorch Conv2d default: U(-1/sqrt(fan_in), 1/sqrt(fan_in)))
# ----------------------------------------------------------------------------
def init_params(key):
    k1, k2, k3, k4 = jax.random.split(key, 4)
    fan1 = C_IN * KH * KW
    fan2 = C_HID * KH * KW
    w1 = jax.random.uniform(k1, (C_HID, C_IN, KH, KW), jnp.float32,
                            -1.0 / np.sqrt(fan1), 1.0 / np.sqrt(fan1))
    b1 = jax.random.uniform(k2, (C_HID,), jnp.float32,
                            -1.0 / np.sqrt(fan1), 1.0 / np.sqrt(fan1))
    w2 = jax.random.uniform(k3, (C_OUT, C_HID, KH, KW), jnp.float32,
                            -1.0 / np.sqrt(fan2), 1.0 / np.sqrt(fan2))
    b2 = jax.random.uniform(k4, (C_OUT,), jnp.float32,
                            -1.0 / np.sqrt(fan2), 1.0 / np.sqrt(fan2))
    return {"w1": w1, "b1": b1, "w2": w2, "b2": b2}


# ----------------------------------------------------------------------------
# Pure-JAX f32 reference (lax conv) for validation
# ----------------------------------------------------------------------------
def _reference_forward(x, params):
    dn = lax.conv_dimension_numbers(x.shape, params["w1"].shape,
                                    ("NCHW", "OIHW", "NCHW"))
    h = lax.conv_general_dilated(x, params["w1"], (2, 2), [(1, 1), (1, 1)],
                                 dimension_numbers=dn)
    h = jnp.maximum(h + params["b1"][None, :, None, None], 0.0)
    dn2 = lax.conv_dimension_numbers(h.shape, params["w2"].shape,
                                     ("NCHW", "OIHW", "NCHW"))
    y = lax.conv_general_dilated(h, params["w2"], (2, 2), [(1, 1), (1, 1)],
                                 dimension_numbers=dn2)
    return jnp.tanh(y + params["b2"][None, :, None, None])


if __name__ == "__main__":
    key = jax.random.PRNGKey(0)
    kx, kp = jax.random.split(key)
    # batch=2, channels=3 (fixed by the module), spatial=16x16
    x = jax.random.normal(kx, (2, 3, 16, 16), jnp.float32)
    params = init_params(kp)

    fwd = jax.jit(generator_forward)
    out = jax.block_until_ready(fwd(x, params))
    assert out.shape == (2, 3, 4, 4), out.shape

    ref = jax.block_until_ready(_reference_forward(x, params))
    # bf16 MXU operands (f32 accumulation) vs. the f32 lax.conv reference:
    # tolerance relaxed to ~1e-2 per the performance review.
    np.testing.assert_allclose(np.asarray(out), np.asarray(ref),
                               rtol=3e-2, atol=3e-2)
    print("KERNEL_OK")
</pallas_src>

<mosaic_0001>
module attributes {stable_mosaic.version = 11 : i64} {
  func.func @_fused_generator_kernel(%arg0: i32, %arg1: memref<1x128x128xbf16, #tpu.memory_space<vmem>>, %arg2: memref<128x64xbf16, #tpu.memory_space<vmem>>, %arg3: memref<1x64xf32, #tpu.memory_space<vmem>>, %arg4: memref<512x128xbf16, #tpu.memory_space<vmem>>, %arg5: memref<16x64x128xbf16, #tpu.memory_space<vmem>>, %arg6: memref<1x128xf32, #tpu.memory_space<vmem>>, %arg7: memref<1x32x128xf32, #tpu.memory_space<vmem>>) attributes {dimension_semantics = [#tpu.dimension_semantics<parallel>], iteration_bounds = array<i64: 1>, scalar_prefetch = 0 : i64, scratch_operands = 0 : i64, tpu.core_type = #tpu.core_type<tc>, window_params = [{transform_indices = @transform_0, window_bounds = array<i64: 1, 128, 128>}, {pipeline_mode = #tpu.pipeline_mode<synchronous>, transform_indices = @transform_1, window_bounds = array<i64: 128, 64>}, {pipeline_mode = #tpu.pipeline_mode<synchronous>, transform_indices = @transform_2, window_bounds = array<i64: 1, 64>}, {pipeline_mode = #tpu.pipeline_mode<synchronous>, transform_indices = @transform_3, window_bounds = array<i64: 512, 128>}, {pipeline_mode = #tpu.pipeline_mode<synchronous>, transform_indices = @transform_4, window_bounds = array<i64: 16, 64, 128>}, {pipeline_mode = #tpu.pipeline_mode<synchronous>, transform_indices = @transform_5, window_bounds = array<i64: 1, 128>}, {transform_indices = @transform_6, window_bounds = array<i64: 1, 32, 128>}]} {
    %c0 = arith.constant 0 : index
    %c0_0 = arith.constant 0 : index
    %c0_1 = arith.constant 0 : index
    %0 = vector.load %arg1[%c0, %c0_0, %c0_1] : memref<1x128x128xbf16, #tpu.memory_space<vmem>>, vector<1x128x128xbf16>
    %1 = vector.shape_cast %0 : vector<1x128x128xbf16> to vector<128x128xbf16>
    %c0_2 = arith.constant 0 : index
    %c0_3 = arith.constant 0 : index
    %2 = vector.load %arg2[%c0_2, %c0_3] : memref<128x64xbf16, #tpu.memory_space<vmem>>, vector<128x64xbf16>
    %cst = arith.constant dense<0.000000e+00> : vector<128x64xf32>
    %3 = tpu.matmul %1, %2, %cst {dimension_numbers = #tpu.dot_dimension_numbers<[1], [0], [0], [1], [0, 0, 1, 1], [], []>} : vector<128x128xbf16>, vector<128x64xbf16>, vector<128x64xf32> -> vector<128x64xf32>
    %c0_4 = arith.constant 0 : index
    %c0_5 = arith.constant 0 : index
    %4 = vector.load %arg3[%c0_4, %c0_5] : memref<1x64xf32, #tpu.memory_space<vmem>>, vector<1x64xf32>
    %5 = vector.broadcast %4 : vector<1x64xf32> to vector<128x64xf32>
    %6 = arith.addf %3, %5 : vector<128x64xf32>
    %cst_6 = arith.constant 0.000000e+00 : f32
    %7 = vector.broadcast %cst_6 : f32 to vector<128x64xf32>
    %8 = arith.maximumf %6, %7 : vector<128x64xf32>
    %9 = arith.truncf %8 : vector<128x64xf32> to vector<128x64xbf16>
    %c0_7 = arith.constant 0 : index
    %c0_8 = arith.constant 0 : index
    %10 = vector.load %arg4[%c0_7, %c0_8] : memref<512x128xbf16, #tpu.memory_space<vmem>>, vector<512x128xbf16>
    %cst_9 = arith.constant dense<0.000000e+00> : vector<512x64xf32>
    %11 = tpu.matmul %10, %9, %cst_9 {dimension_numbers = #tpu.dot_dimension_numbers<[1], [0], [0], [1], [0, 0, 1, 1], [], []>} : vector<512x128xbf16>, vector<128x64xbf16>, vector<512x64xf32> -> vector<512x64xf32>
    %12 = arith.truncf %11 : vector<512x64xf32> to vector<512x64xbf16>
    %cst_10 = arith.constant 0.000000e+00 : f32
    %13 = vector.broadcast %cst_10 : f32 to vector<32x128xf32>
    %cst_11 = arith.constant 0.000000e+00 : f32
    %14 = vector.broadcast %cst_11 : f32 to vector<32x128xf32>
    %cst_12 = arith.constant 0.000000e+00 : f32
    %15 = vector.broadcast %cst_12 : f32 to vector<32x128xf32>
    %cst_13 = arith.constant 0.000000e+00 : f32
    %16 = vector.broadcast %cst_13 : f32 to vector<32x128xf32>
    %17 = vector.extract_strided_slice %12 {offsets = [0, 0], sizes = [32, 64], strides = [1, 1]} : vector<512x64xbf16> to vector<32x64xbf16>
    %c0_14 = arith.constant 0 : index
    %c0_15 = arith.constant 0 : index
    %c0_16 = arith.constant 0 : index
    %18 = vector.load %arg5[%c0_14, %c0_15, %c0_16] : memref<16x64x128xbf16, #tpu.memory_space<vmem>>, vector<1x64x128xbf16>
    %19 = vector.shape_cast %18 : vector<1x64x128xbf16> to vector<64x128xbf16>
    %cst_17 = arith.constant dense<0.000000e+00> : vector<32x128xf32>
    %20 = tpu.matmul %17, %19, %cst_17 {dimension_numbers = #tpu.dot_dimension_numbers<[1], [0], [0], [1], [0, 0, 1, 1], [], []>} : vector<32x64xbf16>, vector<64x128xbf16>, vector<32x128xf32> -> vector<32x128xf32>
    %21 = arith.addf %13, %20 : vector<32x128xf32>
    %22 = vector.extract_strided_slice %12 {offsets = [32, 0], sizes = [32, 64], strides = [1, 1]} : vector<512x64xbf16> to vector<32x64xbf16>
    %c1 = arith.constant 1 : index
    %c0_18 = arith.constant 0 : index
    %c0_19 = arith.constant 0 : index
    %23 = vector.load %arg5[%c1, %c0_18, %c0_19] : memref<16x64x128xbf16, #tpu.memory_space<vmem>>, vector<1x64x128xbf16>
    %24 = vector.shape_cast %23 : vector<1x64x128xbf16> to vector<64x128xbf16>
    %cst_20 = arith.constant dense<0.000000e+00> : vector<32x128xf32>
    %25 = tpu.matmul %22, %24, %cst_20 {dimension_numbers = #tpu.dot_dimension_numbers<[1], [0], [0], [1], [0, 0, 1, 1], [], []>} : vector<32x64xbf16>, vector<64x128xbf16>, vector<32x128xf32> -> vector<32x128xf32>
    %26 = arith.addf %14, %25 : vector<32x128xf32>
    %27 = vector.extract_strided_slice %12 {offsets = [64, 0], sizes = [32, 64], strides = [1, 1]} : vector<512x64xbf16> to vector<32x64xbf16>
    %c2 = arith.constant 2 : index
    %c0_21 = arith.constant 0 : index
    %c0_22 = arith.constant 0 : index
    %28 = vector.load %arg5[%c2, %c0_21, %c0_22] : memref<16x64x128xbf16, #tpu.memory_space<vmem>>, vector<1x64x128xbf16>
    %29 = vector.shape_cast %28 : vector<1x64x128xbf16> to vector<64x128xbf16>
    %cst_23 = arith.constant dense<0.000000e+00> : vector<32x128xf32>
    %30 = tpu.matmul %27, %29, %cst_23 {dimension_numbers = #tpu.dot_dimension_numbers<[1], [0], [0], [1], [0, 0, 1, 1], [], []>} : vector<32x64xbf16>, vector<64x128xbf16>, vector<32x128xf32> -> vector<32x128xf32>
    %31 = arith.addf %15, %30 : vector<32x128xf32>
    %32 = vector.extract_strided_slice %12 {offsets = [96, 0], sizes = [32, 64], strides = [1, 1]} : vector<512x64xbf16> to vector<32x64xbf16>
    %c3 = arith.constant 3 : index
    %c0_24 = arith.constant 0 : index
    %c0_25 = arith.constant 0 : index
    %33 = vector.load %arg5[%c3, %c0_24, %c0_25] : memref<16x64x128xbf16, #tpu.memory_space<vmem>>, vector<1x64x128xbf16>
    %34 = vector.shape_cast %33 : vector<1x64x128xbf16> to vector<64x128xbf16>
    %cst_26 = arith.constant dense<0.000000e+00> : vector<32x128xf32>
    %35 = tpu.matmul %32, %34, %cst_26 {dimension_numbers = #tpu.dot_dimension_numbers<[1], [0], [0], [1], [0, 0, 1, 1], [], []>} : vector<32x64xbf16>, vector<64x128xbf16>, vector<32x128xf32> -> vector<32x128xf32>
    %36 = arith.addf %16, %35 : vector<32x128xf32>
    %37 = vector.extract_strided_slice %12 {offsets = [128, 0], sizes = [32, 64], strides = [1, 1]} : vector<512x64xbf16> to vector<32x64xbf16>
    %c4 = arith.constant 4 : index
    %c0_27 = arith.constant 0 : index
    %c0_28 = arith.constant 0 : index
    %38 = vector.load %arg5[%c4, %c0_27, %c0_28] : memref<16x64x128xbf16, #tpu.memory_space<vmem>>, vector<1x64x128xbf16>
    %39 = vector.shape_cast %38 : vector<1x64x128xbf16> to vector<64x128xbf16>
    %cst_29 = arith.constant dense<0.000000e+00> : vector<32x128xf32>
    %40 = tpu.matmul %37, %39, %cst_29 {dimension_numbers = #tpu.dot_dimension_numbers<[1], [0], [0], [1], [0, 0, 1, 1], [], []>} : vector<32x64xbf16>, vector<64x128xbf16>, vector<32x128xf32> -> vector<32x128xf32>
    %41 = arith.addf %21, %40 : vector<32x128xf32>
    %42 = vector.extract_strided_slice %12 {offsets = [160, 0], sizes = [32, 64], strides = [1, 1]} : vector<512x64xbf16> to vector<32x64xbf16>
    %c5 = arith.constant 5 : index
    %c0_30 = arith.constant 0 : index
    %c0_31 = arith.constant 0 : index
    %43 = vector.load %arg5[%c5, %c0_30, %c0_31] : memref<16x64x128xbf16, #tpu.memory_space<vmem>>, vector<1x64x128xbf16>
    %44 = vector.shape_cast %43 : vector<1x64x128xbf16> to vector<64x128xbf16>
    %cst_32 = arith.constant dense<0.000000e+00> : vector<32x128xf32>
    %45 = tpu.matmul %42, %44, %cst_32 {dimension_numbers = #tpu.dot_dimension_numbers<[1], [0], [0], [1], [0, 0, 1, 1], [], []>} : vector<32x64xbf16>, vector<64x128xbf16>, vector<32x128xf32> -> vector<32x128xf32>
    %46 = arith.addf %26, %45 : vector<32x128xf32>
    %47 = vector.extract_strided_slice %12 {offsets = [192, 0], sizes = [32, 64], strides = [1, 1]} : vector<512x64xbf16> to vector<32x64xbf16>
    %c6 = arith.constant 6 : index
    %c0_33 = arith.constant 0 : index
    %c0_34 = arith.constant 0 : index
    %48 = vector.load %arg5[%c6, %c0_33, %c0_34] : memref<16x64x128xbf16, #tpu.memory_space<vmem>>, vector<1x64x128xbf16>
    %49 = vector.shape_cast %48 : vector<1x64x128xbf16> to vector<64x128xbf16>
    %cst_35 = arith.constant dense<0.000000e+00> : vector<32x128xf32>
    %50 = tpu.matmul %47, %49, %cst_35 {dimension_numbers = #tpu.dot_dimension_numbers<[1], [0], [0], [1], [0, 0, 1, 1], [], []>} : vector<32x64xbf16>, vector<64x128xbf16>, vector<32x128xf32> -> vector<32x128xf32>
    %51 = arith.addf %31, %50 : vector<32x128xf32>
    %52 = vector.extract_strided_slice %12 {offsets = [224, 0], sizes = [32, 64], strides = [1, 1]} : vector<512x64xbf16> to vector<32x64xbf16>
    %c7 = arith.constant 7 : index
    %c0_36 = arith.constant 0 : index
    %c0_37 = arith.constant 0 : index
    %53 = vector.load %arg5[%c7, %c0_36, %c0_37] : memref<16x64x128xbf16, #tpu.memory_space<vmem>>, vector<1x64x128xbf16>
    %54 = vector.shape_cast %53 : vector<1x64x128xbf16> to vector<64x128xbf16>
    %cst_38 = arith.constant dense<0.000000e+00> : vector<32x128xf32>
    %55 = tpu.matmul %52, %54, %cst_38 {dimension_numbers = #tpu.dot_dimension_numbers<[1], [0], [0], [1], [0, 0, 1, 1], [], []>} : vector<32x64xbf16>, vector<64x128xbf16>, vector<32x128xf32> -> vector<32x128xf32>
    %56 = arith.addf %36, %55 : vector<32x128xf32>
    %57 = vector.extract_strided_slice %12 {offsets = [256, 0], sizes = [32, 64], strides = [1, 1]} : vector<512x64xbf16> to vector<32x64xbf16>
    %c8 = arith.constant 8 : index
    %c0_39 = arith.constant 0 : index
    %c0_40 = arith.constant 0 : index
    %58 = vector.load %arg5[%c8, %c0_39, %c0_40] : memref<16x64x128xbf16, #tpu.memory_space<vmem>>, vector<1x64x128xbf16>
    %59 = vector.shape_cast %58 : vector<1x64x128xbf16> to vector<64x128xbf16>
    %cst_41 = arith.constant dense<0.000000e+00> : vector<32x128xf32>
    %60 = tpu.matmul %57, %59, %cst_41 {dimension_numbers = #tpu.dot_dimension_numbers<[1], [0], [0], [1], [0, 0, 1, 1], [], []>} : vector<32x64xbf16>, vector<64x128xbf16>, vector<32x128xf32> -> vector<32x128xf32>
    %61 = arith.addf %41, %60 : vector<32x128xf32>
    %62 = vector.extract_strided_slice %12 {offsets = [288, 0], sizes = [32, 64], strides = [1, 1]} : vector<512x64xbf16> to vector<32x64xbf16>
    %c9 = arith.constant 9 : index
    %c0_42 = arith.constant 0 : index
    %c0_43 = arith.constant 0 : index
    %63 = vector.load %arg5[%c9, %c0_42, %c0_43] : memref<16x64x128xbf16, #tpu.memory_space<vmem>>, vector<1x64x128xbf16>
    %64 = vector.shape_cast %63 : vector<1x64x128xbf16> to vector<64x128xbf16>
    %cst_44 = arith.constant dense<0.000000e+00> : vector<32x128xf32>
    %65 = tpu.matmul %62, %64, %cst_44 {dimension_numbers = #tpu.dot_dimension_numbers<[1], [0], [0], [1], [0, 0, 1, 1], [], []>} : vector<32x64xbf16>, vector<64x128xbf16>, vector<32x128xf32> -> vector<32x128xf32>
    %66 = arith.addf %46, %65 : vector<32x128xf32>
    %67 = vector.extract_strided_slice %12 {offsets = [320, 0], sizes = [32, 64], strides = [1, 1]} : vector<512x64xbf16> to vector<32x64xbf16>
    %c10 = arith.constant 10 : index
    %c0_45 = arith.constant 0 : index
    %c0_46 = arith.constant 0 : index
    %68 = vector.load %arg5[%c10, %c0_45, %c0_46] : memref<16x64x128xbf16, #tpu.memory_space<vmem>>, vector<1x64x128xbf16>
    %69 = vector.shape_cast %68 : vector<1x64x128xbf16> to vector<64x128xbf16>
    %cst_47 = arith.constant dense<0.000000e+00> : vector<32x128xf32>
    %70 = tpu.matmul %67, %69, %cst_47 {dimension_numbers = #tpu.dot_dimension_numbers<[1], [0], [0], [1], [0, 0, 1, 1], [], []>} : vector<32x64xbf16>, vector<64x128xbf16>, vector<32x128xf32> -> vector<32x128xf32>
    %71 = arith.addf %51, %70 : vector<32x128xf32>
    %72 = vector.extract_strided_slice %12 {offsets = [352, 0], sizes = [32, 64], strides = [1, 1]} : vector<512x64xbf16> to vector<32x64xbf16>
    %c11 = arith.constant 11 : index
    %c0_48 = arith.constant 0 : index
    %c0_49 = arith.constant 0 : index
    %73 = vector.load %arg5[%c11, %c0_48, %c0_49] : memref<16x64x128xbf16, #tpu.memory_space<vmem>>, vector<1x64x128xbf16>
    %74 = vector.shape_cast %73 : vector<1x64x128xbf16> to vector<64x128xbf16>
    %cst_50 = arith.constant dense<0.000000e+00> : vector<32x128xf32>
    %75 = tpu.matmul %72, %74, %cst_50 {dimension_numbers = #tpu.dot_dimension_numbers<[1], [0], [0], [1], [0, 0, 1, 1], [], []>} : vector<32x64xbf16>, vector<64x128xbf16>, vector<32x128xf32> -> vector<32x128xf32>
    %76 = arith.addf %56, %75 : vector<32x128xf32>
    %77 = vector.extract_strided_slice %12 {offsets = [384, 0], sizes = [32, 64], strides = [1, 1]} : vector<512x64xbf16> to vector<32x64xbf16>
    %c12 = arith.constant 12 : index
    %c0_51 = arith.constant 0 : index
    %c0_52 = arith.constant 0 : index
    %78 = vector.load %arg5[%c12, %c0_51, %c0_52] : memref<16x64x128xbf16, #tpu.memory_space<vmem>>, vector<1x64x128xbf16>
    %79 = vector.shape_cast %78 : vector<1x64x128xbf16> to vector<64x128xbf16>
    %cst_53 = arith.constant dense<0.000000e+00> : vector<32x128xf32>
    %80 = tpu.matmul %77, %79, %cst_53 {dimension_numbers = #tpu.dot_dimension_numbers<[1], [0], [0], [1], [0, 0, 1, 1], [], []>} : vector<32x64xbf16>, vector<64x128xbf16>, vector<32x128xf32> -> vector<32x128xf32>
    %81 = arith.addf %61, %80 : vector<32x128xf32>
    %82 = vector.extract_strided_slice %12 {offsets = [416, 0], sizes = [32, 64], strides = [1, 1]} : vector<512x64xbf16> to vector<32x64xbf16>
    %c13 = arith.constant 13 : index
    %c0_54 = arith.constant 0 : index
    %c0_55 = arith.constant 0 : index
    %83 = vector.load %arg5[%c13, %c0_54, %c0_55] : memref<16x64x128xbf16, #tpu.memory_space<vmem>>, vector<1x64x128xbf16>
    %84 = vector.shape_cast %83 : vector<1x64x128xbf16> to vector<64x128xbf16>
    %cst_56 = arith.constant dense<0.000000e+00> : vector<32x128xf32>
    %85 = tpu.matmul %82, %84, %cst_56 {dimension_numbers = #tpu.dot_dimension_numbers<[1], [0], [0], [1], [0, 0, 1, 1], [], []>} : vector<32x64xbf16>, vector<64x128xbf16>, vector<32x128xf32> -> vector<32x128xf32>
    %86 = arith.addf %66, %85 : vector<32x128xf32>
    %87 = vector.extract_strided_slice %12 {offsets = [448, 0], sizes = [32, 64], strides = [1, 1]} : vector<512x64xbf16> to vector<32x64xbf16>
    %c14 = arith.constant 14 : index
    %c0_57 = arith.constant 0 : index
    %c0_58 = arith.constant 0 : index
    %88 = vector.load %arg5[%c14, %c0_57, %c0_58] : memref<16x64x128xbf16, #tpu.memory_space<vmem>>, vector<1x64x128xbf16>
    %89 = vector.shape_cast %88 : vector<1x64x128xbf16> to vector<64x128xbf16>
    %cst_59 = arith.constant dense<0.000000e+00> : vector<32x128xf32>
    %90 = tpu.matmul %87, %89, %cst_59 {dimension_numbers = #tpu.dot_dimension_numbers<[1], [0], [0], [1], [0, 0, 1, 1], [], []>} : vector<32x64xbf16>, vector<64x128xbf16>, vector<32x128xf32> -> vector<32x128xf32>
    %91 = arith.addf %71, %90 : vector<32x128xf32>
    %92 = vector.extract_strided_slice %12 {offsets = [480, 0], sizes = [32, 64], strides = [1, 1]} : vector<512x64xbf16> to vector<32x64xbf16>
    %c15 = arith.constant 15 : index
    %c0_60 = arith.constant 0 : index
    %c0_61 = arith.constant 0 : index
    %93 = vector.load %arg5[%c15, %c0_60, %c0_61] : memref<16x64x128xbf16, #tpu.memory_space<vmem>>, vector<1x64x128xbf16>
    %94 = vector.shape_cast %93 : vector<1x64x128xbf16> to vector<64x128xbf16>
    %cst_62 = arith.constant dense<0.000000e+00> : vector<32x128xf32>
    %95 = tpu.matmul %92, %94, %cst_62 {dimension_numbers = #tpu.dot_dimension_numbers<[1], [0], [0], [1], [0, 0, 1, 1], [], []>} : vector<32x64xbf16>, vector<64x128xbf16>, vector<32x128xf32> -> vector<32x128xf32>
    %96 = arith.addf %76, %95 : vector<32x128xf32>
    %97 = arith.addf %81, %86 : vector<32x128xf32>
    %98 = arith.addf %91, %96 : vector<32x128xf32>
    %99 = arith.addf %97, %98 : vector<32x128xf32>
    %c0_63 = arith.constant 0 : index
    %c0_64 = arith.constant 0 : index
    %100 = vector.load %arg6[%c0_63, %c0_64] : memref<1x128xf32, #tpu.memory_space<vmem>>, vector<1x128xf32>
    %101 = vector.broadcast %100 : vector<1x128xf32> to vector<32x128xf32>
    %102 = arith.addf %99, %101 : vector<32x128xf32>
    %103 = math.tanh %102 : vector<32x128xf32>
    %c0_65 = arith.constant 0 : index
    %c0_66 = arith.constant 0 : index
    %c0_67 = arith.constant 0 : index
    %104 = vector.load %arg7[%c0_65, %c0_66, %c0_67] : memref<1x32x128xf32, #tpu.memory_space<vmem>>, vector<1x32x128xf32>
    %105 = vector.shape_cast %104 : vector<1x32x128xf32> to vector<32x128xf32>
    %106 = vector.shape_cast %103 : vector<32x128xf32> to vector<1x32x128xf32>
    tpu.vector_store %arg7[%c0_65, %c0_66, %c0_67], %106 {strides = array<i32>} : memref<1x32x128xf32, #tpu.memory_space<vmem>>, vector<1x32x128xf32>,
    return
  }
  func.func @transform_0(%arg0: i32) -> (i32, i32, i32) {
    %c0_i32 = arith.constant 0 : i32
    %c0_i32_0 = arith.constant 0 : i32
    %c0_i32_1 = arith.constant 0 : i32
    return %arg0, %c0_i32, %c0_i32_0 : i32, i32, i32
  }
  func.func @transform_1(%arg0: i32) -> (i32, i32) {
    %c0_i32 = arith.constant 0 : i32
    %c0_i32_0 = arith.constant 0 : i32
    %c0_i32_1 = arith.constant 0 : i32
    return %c0_i32, %c0_i32_0 : i32, i32
  }
  func.func @transform_2(%arg0: i32) -> (i32, i32) {
    %c0_i32 = arith.constant 0 : i32
    %c0_i32_0 = arith.constant 0 : i32
    %c0_i32_1 = arith.constant 0 : i32
    return %c0_i32, %c0_i32_0 : i32, i32
  }
  func.func @transform_3(%arg0: i32) -> (i32, i32) {
    %c0_i32 = arith.constant 0 : i32
    %c0_i32_0 = arith.constant 0 : i32
    %c0_i32_1 = arith.constant 0 : i32
    return %c0_i32, %c0_i32_0 : i32, i32
  }
  func.func @transform_4(%arg0: i32) -> (i32, i32, i32) {
    %c0_i32 = arith.constant 0 : i32
    %c0_i32_0 = arith.constant 0 : i32
    %c0_i32_1 = arith.constant 0 : i32
    %c0_i32_2 = arith.constant 0 : i32
    return %c0_i32, %c0_i32_0, %c0_i32_1 : i32, i32, i32
  }
  func.func @transform_5(%arg0: i32) -> (i32, i32) {
    %c0_i32 = arith.constant 0 : i32
    %c0_i32_0 = arith.constant 0 : i32
    %c0_i32_1 = arith.constant 0 : i32
    return %c0_i32, %c0_i32_0 : i32, i32
  }
  func.func @transform_6(%arg0: i32) -> (i32, i32, i32) {
    %c0_i32 = arith.constant 0 : i32
    %c0_i32_0 = arith.constant 0 : i32
    %c0_i32_1 = arith.constant 0 : i32
    return %arg0, %c0_i32, %c0_i32_0 : i32, i32, i32
  }
}

</mosaic_0001>

<llo_original>
// kernel: generator_forward.1
$region0: #{generator_forward.1}
  #allocation0 [shape = 'u32[]', space=smem, size = 0x4, offset = 0x4, fixed_abs, tag = 'smem constant byte address 0x4 - core index']
  #allocation1 [shape = 'u32[72,128]{1,0:T(1,128)}', space=vmem, size = 0x9000, scoped, tag = 'internal scratch']
  %s0 = inlined_call_operand.vmem [shape: bf16[1,128,128], index: 0, kind: input, shape index: {}]
  %s1 = inlined_call_operand.vmem [shape: bf16[128,64], index: 1, kind: input, shape index: {}]
  %s2 = inlined_call_operand.vmem [shape: f32[1,64], index: 2, kind: input, shape index: {}]
  %s3 = inlined_call_operand.vmem [shape: bf16[512,128], index: 3, kind: input, shape index: {}]
  %s4 = inlined_call_operand.vmem [shape: bf16[16,64,128], index: 4, kind: input, shape index: {}]
  %s5 = inlined_call_operand.vmem [shape: f32[1,128], index: 5, kind: input, shape index: {}]
  %s6 = inlined_call_operand.vmem [shape: f32[1,32,128], index: 6, kind: output, shape index: {}]
  %s7 = sld [smem:[#allocation0]]
  $region34: #{generator_forward.1} parent=0
    _
  %s9 = ssub.s32 1, %s7
  %s10 = scalar_select 0, %s9, %s7
  // Predicated region
  $region2: #{generator_forward.1} parent=0 // pred_check
    _
  $region3: #{generator_forward.1} parent=0 // pred_check_branch
    %12 = sbr.rel (0) target = $region5
  $region4: #{generator_forward.1} parent=0 // pred_region
    _
  $region5: #{generator_forward.1} parent=0 // pred_fallthru
    _
  // Predicated region
  $region6: #{generator_forward.1} parent=0 // pred_check
    _
  $region7: #{generator_forward.1} parent=0 // pred_check_branch
    %14 = sbr.rel (0) target = $region9
  $region8: #{generator_forward.1} parent=0 // pred_region
    _
  $region9: #{generator_forward.1} parent=0 // pred_fallthru
    _
  // Predicated region
  $region10: #{generator_forward.1} parent=0 // pred_check
    _
  $region11: #{generator_forward.1} parent=0 // pred_check_branch
    %16 = sbr.rel (0) target = $region13
  $region12: #{generator_forward.1} parent=0 // pred_region
    _
  $region13: #{generator_forward.1} parent=0 // pred_fallthru
    _
  // Predicated region
  $region14: #{generator_forward.1} parent=0 // pred_check
    _
  $region15: #{generator_forward.1} parent=0 // pred_check_branch
    %18 = sbr.rel (0) target = $region17
  $region16: #{generator_forward.1} parent=0 // pred_region
    _
  $region17: #{generator_forward.1} parent=0 // pred_fallthru
    _
  // Predicated region
  $region18: #{generator_forward.1} parent=0 // pred_check
    _
  $region19: #{generator_forward.1} parent=0 // pred_check_branch
    %20 = sbr.rel (0) target = $region21
  $region20: #{generator_forward.1} parent=0 // pred_region
    _
  $region21: #{generator_forward.1} parent=0 // pred_fallthru
    _
  // Predicated region
  $region22: #{generator_forward.1} parent=0 // pred_check
    _
  $region23: #{generator_forward.1} parent=0 // pred_check_branch
    %22 = sbr.rel (0) target = $region25
  $region24: #{generator_forward.1} parent=0 // pred_region
    _
  $region25: #{generator_forward.1} parent=0 // pred_fallthru
    _
  %v24 = vld [vmem:[%s0] sm:$0xf]
  %v25 = vld [vmem:[%s0 + $0x4] sm:$0xf]
  %v26 = vld [vmem:[%s0 + $0x8] sm:$0xf]
  %v27 = vld [vmem:[%s0 + $0xc] sm:$0xf]
  %v28 = vld [vmem:[%s0 + $0x10] sm:$0xf]
  %v29 = vld [vmem:[%s0 + $0x14] sm:$0xf]
  %v30 = vld [vmem:[%s0 + $0x18] sm:$0xf]
  %v31 = vld [vmem:[%s0 + $0x1c] sm:$0xf]
  %v32 = vld [vmem:[%s0 + $0x20] sm:$0xf]
  %v33 = vld [vmem:[%s0 + $0x24] sm:$0xf]
  %v34 = vld [vmem:[%s0 + $0x28] sm:$0xf]
  %v35 = vld [vmem:[%s0 + $0x2c] sm:$0xf]
  %v36 = vld [vmem:[%s0 + $0x30] sm:$0xf]
  %v37 = vld [vmem:[%s0 + $0x34] sm:$0xf]
  %v38 = vld [vmem:[%s0 + $0x38] sm:$0xf]
  %v39 = vld [vmem:[%s0 + $0x3c] sm:$0xf]
  %v40 = vld [vmem:[%s1] sm:$0xf]
  %v41 = vld [vmem:[%s1 + $0x4] sm:$0xf]
  %v42 = vld [vmem:[%s1 + $0x8] sm:$0xf]
  %v43 = vld [vmem:[%s1 + $0xc] sm:$0xf]
  %v44 = vld [vmem:[%s1 + $0x10] sm:$0xf]
  %v45 = vld [vmem:[%s1 + $0x14] sm:$0xf]
  %v46 = vld [vmem:[%s1 + $0x18] sm:$0xf]
  %v47 = vld [vmem:[%s1 + $0x1c] sm:$0xf]
  %v48 = vld [vmem:[%s1 + $0x20] sm:$0xf]
  %v49 = vld [vmem:[%s1 + $0x24] sm:$0xf]
  %v50 = vld [vmem:[%s1 + $0x28] sm:$0xf]
  %v51 = vld [vmem:[%s1 + $0x2c] sm:$0xf]
  %v52 = vld [vmem:[%s1 + $0x30] sm:$0xf]
  %v53 = vld [vmem:[%s1 + $0x34] sm:$0xf]
  %v54 = vld [vmem:[%s1 + $0x38] sm:$0xf]
  %v55 = vld [vmem:[%s1 + $0x3c] sm:$0xf]
  %v56 = vld [vmem:[%s2] sm:$0x1]
  %v58 = vperm.slane %v56, 0
  %v76 = vunpack.c.l.b16 %v24
  %v77 = vunpack.c.l.b16 %v25
  %v78 = vunpack.c.l.b16 %v26
  %v79 = vunpack.c.l.b16 %v27
  %v80 = vunpack.c.l.b16 %v28
  %v81 = vunpack.c.l.b16 %v29
  %v82 = vunpack.c.l.b16 %v30
  %v83 = vunpack.c.l.b16 %v31
  %v84 = vunpack.c.l.b16 %v32
  %v85 = vunpack.c.l.b16 %v33
  %v86 = vunpack.c.l.b16 %v34
  %v87 = vunpack.c.l.b16 %v35
  %v88 = vunpack.c.l.b16 %v36
  %v89 = vunpack.c.l.b16 %v37
  %v90 = vunpack.c.l.b16 %v38
  %v91 = vunpack.c.l.b16 %v39
  %v92 = vpack.c.b16 %v77, %v76
  %v93 = vpack.c.b16 %v79, %v78
  %v94 = vpack.c.b16 %v81, %v80
  %v95 = vpack.c.b16 %v83, %v82
  %v96 = vpack.c.b16 %v85, %v84
  %v97 = vpack.c.b16 %v87, %v86
  %v98 = vpack.c.b16 %v89, %v88
  %v99 = vpack.c.b16 %v91, %v90
  %v124 = vunpack.c.l.b16 %v40
  %v125 = vunpack.c.l.b16 %v41
  %v126 = vunpack.c.l.b16 %v42
  %v127 = vunpack.c.l.b16 %v43
  %v128 = vunpack.c.l.b16 %v44
  %v129 = vunpack.c.l.b16 %v45
  %v130 = vunpack.c.l.b16 %v46
  %v131 = vunpack.c.l.b16 %v47
  %v132 = vunpack.c.l.b16 %v48
  %v133 = vunpack.c.l.b16 %v49
  %v134 = vunpack.c.l.b16 %v50
  %v135 = vunpack.c.l.b16 %v51
  %v136 = vunpack.c.l.b16 %v52
  %v137 = vunpack.c.l.b16 %v53
  %v138 = vunpack.c.l.b16 %v54
  %v139 = vunpack.c.l.b16 %v55
  %v140 = vpack.c.b16 %v125, %v124
  %v141 = vpack.c.b16 %v127, %v126
  %v142 = vpack.c.b16 %v129, %v128
  %v143 = vpack.c.b16 %v131, %v130
  %v144 = vpack.c.b16 %v133, %v132
  %v145 = vpack.c.b16 %v135, %v134
  %v146 = vpack.c.b16 %v137, %v136
  %v147 = vpack.c.b16 %v139, %v138
  %156 = vmatpush.bf16.msra.mxu0 %v147
  %157 = vmatpush.bf16.msra.mxu0 %v146
  %158 = vmatpush.bf16.msra.mxu0 %v145
  %159 = vmatpush.bf16.msra.mxu0 %v144
  %160 = vmatpush.bf16.msra.mxu0 %v143
  %161 = vmatpush.bf16.msra.mxu0 %v142
  %162 = vmatpush.bf16.msra.mxu0 %v141
  %163 = vmatpush.bf16.msra.mxu0 %v140
  %164 = vmatmul.bf16.gmra.mxu0 %v92
  %v165 = vpop.f32.mrf.mxu0
  %v166 = vadd.f32 %v58, %v165
  %v167 = vpop.f32.mrf.mxu0
  %v168 = vadd.f32 %v58, %v167
  %169 = vmatmul.bf16.gmra.mxu0 %v93
  %v170 = vpop.f32.mrf.mxu0
  %v171 = vadd.f32 %v58, %v170
  %v172 = vpop.f32.mrf.mxu0
  %v173 = vadd.f32 %v58, %v172
  %174 = vmatmul.bf16.gmra.mxu0 %v94
  %v175 = vpop.f32.mrf.mxu0
  %v176 = vadd.f32 %v58, %v175
  %v177 = vpop.f32.mrf.mxu0
  %v178 = vadd.f32 %v58, %v177
  %179 = vmatmul.bf16.gmra.mxu0 %v95
  %v180 = vpop.f32.mrf.mxu0
  %v181 = vadd.f32 %v58, %v180
  %v182 = vpop.f32.mrf.mxu0
  %v183 = vadd.f32 %v58, %v182
  %184 = vmatmul.bf16.gmra.mxu0 %v96
  %v185 = vpop.f32.mrf.mxu0
  %v186 = vadd.f32 %v58, %v185
  %v187 = vpop.f32.mrf.mxu0
  %v188 = vadd.f32 %v58, %v187
  %189 = vmatmul.bf16.gmra.mxu0 %v97
  %v190 = vpop.f32.mrf.mxu0
  %v191 = vadd.f32 %v58, %v190
  %v192 = vpop.f32.mrf.mxu0
  %v193 = vadd.f32 %v58, %v192
  %194 = vmatmul.bf16.gmra.mxu0 %v98
  %v195 = vpop.f32.mrf.mxu0
  %v196 = vadd.f32 %v58, %v195
  %v197 = vpop.f32.mrf.mxu0
  %v198 = vadd.f32 %v58, %v197
  %199 = vmatmul.bf16.gmra.mxu0 %v99
  %v200 = vpop.f32.mrf.mxu0
  %v201 = vadd.f32 %v58, %v200
  %v202 = vpop.f32.mrf.mxu0
  %v203 = vadd.f32 %v58, %v202
  %204 = vdwg.mxu0
  %v205 = vmax.f32 %v166, 0.0
  %v206 = vmax.f32 %v168, 0.0
  %v207 = vmax.f32 %v171, 0.0
  %v208 = vmax.f32 %v173, 0.0
  %v209 = vmax.f32 %v176, 0.0
  %v210 = vmax.f32 %v178, 0.0
  %v211 = vmax.f32 %v181, 0.0
  %v212 = vmax.f32 %v183, 0.0
  %v213 = vmax.f32 %v186, 0.0
  %v214 = vmax.f32 %v188, 0.0
  %v215 = vmax.f32 %v191, 0.0
  %v216 = vmax.f32 %v193, 0.0
  %v217 = vmax.f32 %v196, 0.0
  %v218 = vmax.f32 %v198, 0.0
  %v219 = vmax.f32 %v201, 0.0
  %v220 = vmax.f32 %v203, 0.0
  %v221 = vpack.c.bf16 %v206, %v205
  %v222 = vpack.c.bf16 %v208, %v207
  %v223 = vpack.c.bf16 %v210, %v209
  %v224 = vpack.c.bf16 %v212, %v211
  %v225 = vpack.c.bf16 %v214, %v213
  %v226 = vpack.c.bf16 %v216, %v215
  %v227 = vpack.c.bf16 %v218, %v217
  %v228 = vpack.c.bf16 %v220, %v219
  %v229 = vld [vmem:[%s3] sm:$0xf]
  %v230 = vld [vmem:[%s3 + $0x4] sm:$0xf]
  %v231 = vld [vmem:[%s3 + $0x8] sm:$0xf]
  %v232 = vld [vmem:[%s3 + $0xc] sm:$0xf]
  %v233 = vld [vmem:[%s3 + $0x10] sm:$0xf]
  %v234 = vld [vmem:[%s3 + $0x14] sm:$0xf]
  %v235 = vld [vmem:[%s3 + $0x18] sm:$0xf]
  %v236 = vld [vmem:[%s3 + $0x1c] sm:$0xf]
  %v237 = vld [vmem:[%s3 + $0x20] sm:$0xf]
  %v238 = vld [vmem:[%s3 + $0x24] sm:$0xf]
  %v239 = vld [vmem:[%s3 + $0x28] sm:$0xf]
  %v240 = vld [vmem:[%s3 + $0x2c] sm:$0xf]
  %v241 = vld [vmem:[%s3 + $0x30] sm:$0xf]
  %v242 = vld [vmem:[%s3 + $0x34] sm:$0xf]
  %v243 = vld [vmem:[%s3 + $0x38] sm:$0xf]
  %v244 = vld [vmem:[%s3 + $0x3c] sm:$0xf]
  %v245 = vld [vmem:[%s3 + $0x40] sm:$0xf]
  %v246 = vld [vmem:[%s3 + $0x44] sm:$0xf]
  %v247 = vld [vmem:[%s3 + $0x48] sm:$0xf]
  %v248 = vld [vmem:[%s3 + $0x4c] sm:$0xf]
  %v249 = vld [vmem:[%s3 + $0x50] sm:$0xf]
  %v250 = vld [vmem:[%s3 + $0x54] sm:$0xf]
  %v251 = vld [vmem:[%s3 + $0x58] sm:$0xf]
  %v252 = vld [vmem:[%s3 + $0x5c] sm:$0xf]
  %v253 = vld [vmem:[%s3 + $0x60] sm:$0xf]
  %v254 = vld [vmem:[%s3 + $0x64] sm:$0xf]
  %v255 = vld [vmem:[%s3 + $0x68] sm:$0xf]
  %v256 = vld [vmem:[%s3 + $0x6c] sm:$0xf]
  %v257 = vld [vmem:[%s3 + $0x70] sm:$0xf]
  %v258 = vld [vmem:[%s3 + $0x74] sm:$0xf]
  %v259 = vld [vmem:[%s3 + $0x78] sm:$0xf]
  %v260 = vld [vmem:[%s3 + $0x7c] sm:$0xf]
  %v261 = vld [vmem:[%s3 + $0x80] sm:$0xf]
  %v262 = vld [vmem:[%s3 + $0x84] sm:$0xf]
  %v263 = vld [vmem:[%s3 + $0x88] sm:$0xf]
  %v264 = vld [vmem:[%s3 + $0x8c] sm:$0xf]
  %v265 = vld [vmem:[%s3 + $0x90] sm:$0xf]
  %v266 = vld [vmem:[%s3 + $0x94] sm:$0xf]
  %v267 = vld [vmem:[%s3 + $0x98] sm:$0xf]
  %v268 = vld [vmem:[%s3 + $0x9c] sm:$0xf]
  %v269 = vld [vmem:[%s3 + $0xa0] sm:$0xf]
  %v270 = vld [vmem:[%s3 + $0xa4] sm:$0xf]
  %v271 = vld [vmem:[%s3 + $0xa8] sm:$0xf]
  %v272 = vld [vmem:[%s3 + $0xac] sm:$0xf]
  %v273 = vld [vmem:[%s3 + $0xb0] sm:$0xf]
  %v274 = vld [vmem:[%s3 + $0xb4] sm:$0xf]
  %v275 = vld [vmem:[%s3 + $0xb8] sm:$0xf]
  %v276 = vld [vmem:[%s3 + $0xbc] sm:$0xf]
  %v277 = vld [vmem:[%s3 + $0xc0] sm:$0xf]
  %v278 = vld [vmem:[%s3 + $0xc4] sm:$0xf]
  %v279 = vld [vmem:[%s3 + $0xc8] sm:$0xf]
  %v280 = vld [vmem:[%s3 + $0xcc] sm:$0xf]
  %v281 = vld [vmem:[%s3 + $0xd0] sm:$0xf]
  %v282 = vld [vmem:[%s3 + $0xd4] sm:$0xf]
  %v283 = vld [vmem:[%s3 + $0xd8] sm:$0xf]
  %v284 = vld [vmem:[%s3 + $0xdc] sm:$0xf]
  %v285 = vld [vmem:[%s3 + $0xe0] sm:$0xf]
  %v286 = vld [vmem:[%s3 + $0xe4] sm:$0xf]
  %v287 = vld [vmem:[%s3 + $0xe8] sm:$0xf]
  %v288 = vld [vmem:[%s3 + $0xec] sm:$0xf]
  %v289 = vld [vmem:[%s3 + $0xf0] sm:$0xf]
  %v290 = vld [vmem:[%s3 + $0xf4] sm:$0xf]
  %v291 = vld [vmem:[%s3 + $0xf8] sm:$0xf]
  %v292 = vld [vmem:[%s3 + $0xfc] sm:$0xf]
  %v357 = vunpack.c.l.b16 %v229
  %v358 = vunpack.c.l.b16 %v230
  %v359 = vunpack.c.l.b16 %v231
  %v360 = vunpack.c.l.b16 %v232
  %v361 = vunpack.c.l.b16 %v233
  %v362 = vunpack.c.l.b16 %v234
  %v363 = vunpack.c.l.b16 %v235
  %v364 = vunpack.c.l.b16 %v236
  %v365 = vunpack.c.l.b16 %v237
  %v366 = vunpack.c.l.b16 %v238
  %v367 = vunpack.c.l.b16 %v239
  %v368 = vunpack.c.l.b16 %v240
  %v369 = vunpack.c.l.b16 %v241
  %v370 = vunpack.c.l.b16 %v242
  %v371 = vunpack.c.l.b16 %v243
  %v372 = vunpack.c.l.b16 %v244
  %v373 = vunpack.c.l.b16 %v245
  %v374 = vunpack.c.l.b16 %v246
  %v375 = vunpack.c.l.b16 %v247
  %v376 = vunpack.c.l.b16 %v248
  %v377 = vunpack.c.l.b16 %v249
  %v378 = vunpack.c.l.b16 %v250
  %v379 = vunpack.c.l.b16 %v251
  %v380 = vunpack.c.l.b16 %v252
  %v381 = vunpack.c.l.b16 %v253
  %v382 = vunpack.c.l.b16 %v254
  %v383 = vunpack.c.l.b16 %v255
  %v384 = vunpack.c.l.b16 %v256
  %v385 = vunpack.c.l.b16 %v257
  %v386 = vunpack.c.l.b16 %v258
  %v387 = vunpack.c.l.b16 %v259
  %v388 = vunpack.c.l.b16 %v260
  %v389 = vunpack.c.l.b16 %v261
  %v390 = vunpack.c.l.b16 %v262
  %v391 = vunpack.c.l.b16 %v263
  %v392 = vunpack.c.l.b16 %v264
  %v393 = vunpack.c.l.b16 %v265
  %v394 = vunpack.c.l.b16 %v266
  %v395 = vunpack.c.l.b16 %v267
  %v396 = vunpack.c.l.b16 %v268
  %v397 = vunpack.c.l.b16 %v269
  %v398 = vunpack.c.l.b16 %v270
  %v399 = vunpack.c.l.b16 %v271
  %v400 = vunpack.c.l.b16 %v272
  %v401 = vunpack.c.l.b16 %v273
  %v402 = vunpack.c.l.b16 %v274
  %v403 = vunpack.c.l.b16 %v275
  %v404 = vunpack.c.l.b16 %v276
  %v405 = vunpack.c.l.b16 %v277
  %v406 = vunpack.c.l.b16 %v278
  %v407 = vunpack.c.l.b16 %v279
  %v408 = vunpack.c.l.b16 %v280
  %v409 = vunpack.c.l.b16 %v281
  %v410 = vunpack.c.l.b16 %v282
  %v411 = vunpack.c.l.b16 %v283
  %v412 = vunpack.c.l.b16 %v284
  %v413 = vunpack.c.l.b16 %v285
  %v414 = vunpack.c.l.b16 %v286
  %v415 = vunpack.c.l.b16 %v287
  %v416 = vunpack.c.l.b16 %v288
  %v417 = vunpack.c.l.b16 %v289
  %v418 = vunpack.c.l.b16 %v290
  %v419 = vunpack.c.l.b16 %v291
  %v420 = vunpack.c.l.b16 %v292
  %v421 = vpack.c.b16 %v358, %v357
  %v422 = vpack.c.b16 %v360, %v359
  %v423 = vpack.c.b16 %v362, %v361
  %v424 = vpack.c.b16 %v364, %v363
  %v425 = vpack.c.b16 %v366, %v365
  %v426 = vpack.c.b16 %v368, %v367
  %v427 = vpack.c.b16 %v370, %v369
  %v428 = vpack.c.b16 %v372, %v371
  %v429 = vpack.c.b16 %v374, %v373
  %v430 = vpack.c.b16 %v376, %v375
  %v431 = vpack.c.b16 %v378, %v377
  %v432 = vpack.c.b16 %v380, %v379
  %v433 = vpack.c.b16 %v382, %v381
  %v434 = vpack.c.b16 %v384, %v383
  %v435 = vpack.c.b16 %v386, %v385
  %v436 = vpack.c.b16 %v388, %v387
  %v437 = vpack.c.b16 %v390, %v389
  %v438 = vpack.c.b16 %v392, %v391
  %v439 = vpack.c.b16 %v394, %v393
  %v440 = vpack.c.b16 %v396, %v395
  %v441 = vpack.c.b16 %v398, %v397
  %v442 = vpack.c.b16 %v400, %v399
  %v443 = vpack.c.b16 %v402, %v401
  %v444 = vpack.c.b16 %v404, %v403
  %v445 = vpack.c.b16 %v406, %v405
  %v446 = vpack.c.b16 %v408, %v407
  %v447 = vpack.c.b16 %v410, %v409
  %v448 = vpack.c.b16 %v412, %v411
  %v449 = vpack.c.b16 %v414, %v413
  %v450 = vpack.c.b16 %v416, %v415
  %v451 = vpack.c.b16 %v418, %v417
  %v452 = vpack.c.b16 %v420, %v419
  %485 = vmatpush.bf16.msra.mxu0 %v228
  %486 = vmatpush.bf16.msra.mxu0 %v227
  %487 = vmatpush.bf16.msra.mxu0 %v226
  %488 = vmatpush.bf16.msra.mxu0 %v225
  %489 = vmatpush.bf16.msra.mxu0 %v224
  %490 = vmatpush.bf16.msra.mxu0 %v223
  %491 = vmatpush.bf16.msra.mxu0 %v222
  %492 = vmatpush.bf16.msra.mxu0 %v221
  %493 = vmatmul.bf16.gmra.mxu0 %v421
  %v494 = vpop.f32.mrf.mxu0
  %v495 = vadd.f32 0.0, %v494
  %v496 = vpop.f32.mrf.mxu0
  %v497 = vadd.f32 0.0, %v496
  %498 = vmatmul.bf16.gmra.mxu0 %v422
  %v499 = vpop.f32.mrf.mxu0
  %v500 = vadd.f32 0.0, %v499
  %v501 = vpop.f32.mrf.mxu0
  %v502 = vadd.f32 0.0, %v501
  %503 = vmatmul.bf16.gmra.mxu0 %v423
  %v504 = vpop.f32.mrf.mxu0
  %v505 = vadd.f32 0.0, %v504
  %v506 = vpop.f32.mrf.mxu0
  %v507 = vadd.f32 0.0, %v506
  %508 = vmatmul.bf16.gmra.mxu0 %v424
  %v509 = vpop.f32.mrf.mxu0
  %v510 = vadd.f32 0.0, %v509
  %v511 = vpop.f32.mrf.mxu0
  %v512 = vadd.f32 0.0, %v511
  %513 = vmatmul.bf16.gmra.mxu0 %v425
  %v514 = vpop.f32.mrf.mxu0
  %v515 = vadd.f32 0.0, %v514
  %v516 = vpop.f32.mrf.mxu0
  %v517 = vadd.f32 0.0, %v516
  %518 = vmatmul.bf16.gmra.mxu0 %v426
  %v519 = vpop.f32.mrf.mxu0
  %v520 = vadd.f32 0.0, %v519
  %v521 = vpop.f32.mrf.mxu0
  %v522 = vadd.f32 0.0, %v521
  %523 = vmatmul.bf16.gmra.mxu0 %v427
  %v524 = vpop.f32.mrf.mxu0
  %v525 = vadd.f32 0.0, %v524
  %v526 = vpop.f32.mrf.mxu0
  %v527 = vadd.f32 0.0, %v526
  %528 = vmatmul.bf16.gmra.mxu0 %v428
  %v529 = vpop.f32.mrf.mxu0
  %v530 = vadd.f32 0.0, %v529
  %v531 = vpop.f32.mrf.mxu0
  %v532 = vadd.f32 0.0, %v531
  %533 = vmatmul.bf16.gmra.mxu0 %v429
  %v534 = vpop.f32.mrf.mxu0
  %v535 = vadd.f32 0.0, %v534
  %v536 = vpop.f32.mrf.mxu0
  %v537 = vadd.f32 0.0, %v536
  %538 = vmatmul.bf16.gmra.mxu0 %v430
  %v539 = vpop.f32.mrf.mxu0
  %v540 = vadd.f32 0.0, %v539
  %v541 = vpop.f32.mrf.mxu0
  %v542 = vadd.f32 0.0, %v541
  %543 = vmatmul.bf16.gmra.mxu0 %v431
  %v544 = vpop.f32.mrf.mxu0
  %v545 = vadd.f32 0.0, %v544
  %v546 = vpop.f32.mrf.mxu0
  %v547 = vadd.f32 0.0, %v546
  %548 = vmatmul.bf16.gmra.mxu0 %v432
  %v549 = vpop.f32.mrf.mxu0
  %v550 = vadd.f32 0.0, %v549
  %v551 = vpop.f32.mrf.mxu0
  %v552 = vadd.f32 0.0, %v551
  %553 = vmatmul.bf16.gmra.mxu0 %v433
  %v554 = vpop.f32.mrf.mxu0
  %v555 = vadd.f32 0.0, %v554
  %v556 = vpop.f32.mrf.mxu0
  %v557 = vadd.f32 0.0, %v556
  %558 = vmatmul.bf16.gmra.mxu0 %v434
  %v559 = vpop.f32.mrf.mxu0
  %v560 = vadd.f32 0.0, %v559
  %v561 = vpop.f32.mrf.mxu0
  %v562 = vadd.f32 0.0, %v561
  %563 = vmatmul.bf16.gmra.mxu0 %v435
  %v564 = vpop.f32.mrf.mxu0
  %v565 = vadd.f32 0.0, %v564
  %v566 = vpop.f32.mrf.mxu0
  %v567 = vadd.f32 0.0, %v566
  %568 = vmatmul.bf16.gmra.mxu0 %v436
  %v569 = vpop.f32.mrf.mxu0
  %v570 = vadd.f32 0.0, %v569
  %v571 = vpop.f32.mrf.mxu0
  %v572 = vadd.f32 0.0, %v571
  %573 = vmatmul.bf16.gmra.mxu0 %v437
  %v574 = vpop.f32.mrf.mxu0
  %v575 = vadd.f32 0.0, %v574
  %v576 = vpop.f32.mrf.mxu0
  %v577 = vadd.f32 0.0, %v576
  %578 = vmatmul.bf16.gmra.mxu0 %v438
  %v579 = vpop.f32.mrf.mxu0
  %v580 = vadd.f32 0.0, %v579
  %v581 = vpop.f32.mrf.mxu0
  %v582 = vadd.f32 0.0, %v581
  %583 = vmatmul.bf16.gmra.mxu0 %v439
  %v584 = vpop.f32.mrf.mxu0
  %v585 = vadd.f32 0.0, %v584
  %v586 = vpop.f32.mrf.mxu0
  %v587 = vadd.f32 0.0, %v586
  %588 = vmatmul.bf16.gmra.mxu0 %v440
  %v589 = vpop.f32.mrf.mxu0
  %v590 = vadd.f32 0.0, %v589
  %v591 = vpop.f32.mrf.mxu0
  %v592 = vadd.f32 0.0, %v591
  %593 = vmatmul.bf16.gmra.mxu0 %v441
  %v594 = vpop.f32.mrf.mxu0
  %v595 = vadd.f32 0.0, %v594
  %v596 = vpop.f32.mrf.mxu0
  %v597 = vadd.f32 0.0, %v596
  %598 = vmatmul.bf16.gmra.mxu0 %v442
  %v599 = vpop.f32.mrf.mxu0
  %v600 = vadd.f32 0.0, %v599
  %v601 = vpop.f32.mrf.mxu0
  %v602 = vadd.f32 0.0, %v601
  %603 = vmatmul.bf16.gmra.mxu0 %v443
  %v604 = vpop.f32.mrf.mxu0
  %v605 = vadd.f32 0.0, %v604
  %v606 = vpop.f32.mrf.mxu0
  %v607 = vadd.f32 0.0, %v606
  %608 = vmatmul.bf16.gmra.mxu0 %v444
  %v609 = vpop.f32.mrf.mxu0
  %v610 = vadd.f32 0.0, %v609
  %v611 = vpop.f32.mrf.mxu0
  %v612 = vadd.f32 0.0, %v611
  %613 = vmatmul.bf16.gmra.mxu0 %v445
  %v614 = vpop.f32.mrf.mxu0
  %v615 = vadd.f32 0.0, %v614
  %v616 = vpop.f32.mrf.mxu0
  %v617 = vadd.f32 0.0, %v616
  %618 = vmatmul.bf16.gmra.mxu0 %v446
  %v619 = vpop.f32.mrf.mxu0
  %v620 = vadd.f32 0.0, %v619
  %v621 = vpop.f32.mrf.mxu0
  %v622 = vadd.f32 0.0, %v621
  %623 = vmatmul.bf16.gmra.mxu0 %v447
  %v624 = vpop.f32.mrf.mxu0
  %v625 = vadd.f32 0.0, %v624
  %v626 = vpop.f32.mrf.mxu0
  %v627 = vadd.f32 0.0, %v626
  %628 = vmatmul.bf16.gmra.mxu0 %v448
  %v629 = vpop.f32.mrf.mxu0
  %v630 = vadd.f32 0.0, %v629
  %v631 = vpop.f32.mrf.mxu0
  %v632 = vadd.f32 0.0, %v631
  %633 = vmatmul.bf16.gmra.mxu0 %v449
  %v634 = vpop.f32.mrf.mxu0
  %v635 = vadd.f32 0.0, %v634
  %v636 = vpop.f32.mrf.mxu0
  %v637 = vadd.f32 0.0, %v636
  %638 = vmatmul.bf16.gmra.mxu0 %v450
  %v639 = vpop.f32.mrf.mxu0
  %v640 = vadd.f32 0.0, %v639
  %v641 = vpop.f32.mrf.mxu0
  %v642 = vadd.f32 0.0, %v641
  %643 = vmatmul.bf16.gmra.mxu0 %v451
  %v644 = vpop.f32.mrf.mxu0
  %v645 = vadd.f32 0.0, %v644
  %v646 = vpop.f32.mrf.mxu0
  %v647 = vadd.f32 0.0, %v646
  %648 = vmatmul.bf16.gmra.mxu0 %v452
  %v649 = vpop.f32.mrf.mxu0
  %v650 = vadd.f32 0.0, %v649
  %v651 = vpop.f32.mrf.mxu0
  %v652 = vadd.f32 0.0, %v651
  %653 = vdwg.mxu0
  %v654 = vpack.c.bf16 %v495, %v495
  %v655 = vpack.c.bf16 %v497, %v497
  %v656 = vpack.c.bf16 %v500, %v500
  %v657 = vpack.c.bf16 %v502, %v502
  %v658 = vpack.c.bf16 %v505, %v505
  %v659 = vpack.c.bf16 %v507, %v507
  %v660 = vpack.c.bf16 %v510, %v510
  %v661 = vpack.c.bf16 %v512, %v512
  %v662 = vpack.c.bf16 %v515, %v515
  %v663 = vpack.c.bf16 %v517, %v517
  %v664 = vpack.c.bf16 %v520, %v520
  %v665 = vpack.c.bf16 %v522, %v522
  %v666 = vpack.c.bf16 %v525, %v525
  %v667 = vpack.c.bf16 %v527, %v527
  %v668 = vpack.c.bf16 %v530, %v530
  %v669 = vpack.c.bf16 %v532, %v532
  %v670 = vpack.c.bf16 %v535, %v535
  %v671 = vpack.c.bf16 %v537, %v537
  %v672 = vpack.c.bf16 %v540, %v540
  %v673 = vpack.c.bf16 %v542, %v542
  %v674 = vpack.c.bf16 %v545, %v545
  %v675 = vpack.c.bf16 %v547, %v547
  %v676 = vpack.c.bf16 %v550, %v550
  %v677 = vpack.c.bf16 %v552, %v552
  %v678 = vpack.c.bf16 %v555, %v555
  %v679 = vpack.c.bf16 %v557, %v557
  %v680 = vpack.c.bf16 %v560, %v560
  %v681 = vpack.c.bf16 %v562, %v562
  %v682 = vpack.c.bf16 %v565, %v565
  %v683 = vpack.c.bf16 %v567, %v567
  %v684 = vpack.c.bf16 %v570, %v570
  %v685 = vpack.c.bf16 %v572, %v572
  %v686 = vpack.c.bf16 %v575, %v575
  %v687 = vpack.c.bf16 %v577, %v577
  %v688 = vpack.c.bf16 %v580, %v580
  %v689 = vpack.c.bf16 %v582, %v582
  %v690 = vpack.c.bf16 %v585, %v585
  %v691 = vpack.c.bf16 %v587, %v587
  %v692 = vpack.c.bf16 %v590, %v590
  %v693 = vpack.c.bf16 %v592, %v592
  %v694 = vpack.c.bf16 %v595, %v595
  %v695 = vpack.c.bf16 %v597, %v597
  %v696 = vpack.c.bf16 %v600, %v600
  %v697 = vpack.c.bf16 %v602, %v602
  %v698 = vpack.c.bf16 %v605, %v605
  %v699 = vpack.c.bf16 %v607, %v607
  %v700 = vpack.c.bf16 %v610, %v610
  %v701 = vpack.c.bf16 %v612, %v612
  %v702 = vpack.c.bf16 %v615, %v615
  %v703 = vpack.c.bf16 %v617, %v617
  %v704 = vpack.c.bf16 %v620, %v620
  %v705 = vpack.c.bf16 %v622, %v622
  %v706 = vpack.c.bf16 %v625, %v625
  %v707 = vpack.c.bf16 %v627, %v627
  %v708 = vpack.c.bf16 %v630, %v630
  %v709 = vpack.c.bf16 %v632, %v632
  %v710 = vpack.c.bf16 %v635, %v635
  %v711 = vpack.c.bf16 %v637, %v637
  %v712 = vpack.c.bf16 %v640, %v640
  %v713 = vpack.c.bf16 %v642, %v642
  %v714 = vpack.c.bf16 %v645, %v645
  %v715 = vpack.c.bf16 %v647, %v647
  %v716 = vpack.c.bf16 %v650, %v650
  %v717 = vpack.c.bf16 %v652, %v652
  %v718 = vld [vmem:[%s4] sm:$0xf]
  %v719 = vld [vmem:[%s4 + $0x4] sm:$0xf]
  %v720 = vld [vmem:[%s4 + $0x8] sm:$0xf]
  %v721 = vld [vmem:[%s4 + $0xc] sm:$0xf]
  %v722 = vld [vmem:[%s4 + $0x10] sm:$0xf]
  %v723 = vld [vmem:[%s4 + $0x14] sm:$0xf]
  %v724 = vld [vmem:[%s4 + $0x18] sm:$0xf]
  %v725 = vld [vmem:[%s4 + $0x1c] sm:$0xf]
  %s726 = scalar_lea.vmem %s4, 32
  %v727 = vld [vmem:[%s726] sm:$0xf]
  %v728 = vld [vmem:[%s726 + $0x4] sm:$0xf]
  %v729 = vld [vmem:[%s726 + $0x8] sm:$0xf]
  %v730 = vld [vmem:[%s726 + $0xc] sm:$0xf]
  %v731 = vld [vmem:[%s726 + $0x10] sm:$0xf]
  %v732 = vld [vmem:[%s726 + $0x14] sm:$0xf]
  %v733 = vld [vmem:[%s726 + $0x18] sm:$0xf]
  %v734 = vld [vmem:[%s726 + $0x1c] sm:$0xf]
  %s735 = scalar_lea.vmem %s4, 64
  %v736 = vld [vmem:[%s735] sm:$0xf]
  %v737 = vld [vmem:[%s735 + $0x4] sm:$0xf]
  %v738 = vld [vmem:[%s735 + $0x8] sm:$0xf]
  %v739 = vld [vmem:[%s735 + $0xc] sm:$0xf]
  %v740 = vld [vmem:[%s735 + $0x10] sm:$0xf]
  %v741 = vld [vmem:[%s735 + $0x14] sm:$0xf]
  %v742 = vld [vmem:[%s735 + $0x18] sm:$0xf]
  %v743 = vld [vmem:[%s735 + $0x1c] sm:$0xf]
  %s744 = scalar_lea.vmem %s4, 96
  %v745 = vld [vmem:[%s744] sm:$0xf]
  %v746 = vld [vmem:[%s744 + $0x4] sm:$0xf]
  %v747 = vld [vmem:[%s744 + $0x8] sm:$0xf]
  %v748 = vld [vmem:[%s744 + $0xc] sm:$0xf]
  %v749 = vld [vmem:[%s744 + $0x10] sm:$0xf]
  %v750 = vld [vmem:[%s744 + $0x14] sm:$0xf]
  %v751 = vld [vmem:[%s744 + $0x18] sm:$0xf]
  %v752 = vld [vmem:[%s744 + $0x1c] sm:$0xf]
  %s753 = scalar_lea.vmem %s4, 128
  %v754 = vld [vmem:[%s753] sm:$0xf]
  %v755 = vld [vmem:[%s753 + $0x4] sm:$0xf]
  %v756 = vld [vmem:[%s753 + $0x8] sm:$0xf]
  %v757 = vld [vmem:[%s753 + $0xc] sm:$0xf]
  %v758 = vld [vmem:[%s753 + $0x10] sm:$0xf]
  %v759 = vld [vmem:[%s753 + $0x14] sm:$0xf]
  %v760 = vld [vmem:[%s753 + $0x18] sm:$0xf]
  %v761 = vld [vmem:[%s753 + $0x1c] sm:$0xf]
  %v766 = vunpack.c.l.b16 %v670
  %v767 = vunpack.c.l.b16 %v671
  %v768 = vunpack.c.l.b16 %v672
  %v769 = vunpack.c.l.b16 %v673
  %v770 = vpack.c.b16 %v767, %v766
  %v771 = vpack.c.b16 %v769, %v768
  %v780 = vunpack.c.l.b16 %v754
  %v781 = vunpack.c.l.b16 %v755
  %v782 = vunpack.c.l.b16 %v756
  %v783 = vunpack.c.l.b16 %v757
  %v784 = vunpack.c.l.b16 %v758
  %v785 = vunpack.c.l.b16 %v759
  %v786 = vunpack.c.l.b16 %v760
  %v787 = vunpack.c.l.b16 %v761
  %v788 = vpack.c.b16 %v781, %v780
  %v789 = vpack.c.b16 %v783, %v782
  %v790 = vpack.c.b16 %v785, %v784
  %v791 = vpack.c.b16 %v787, %v786
  %vm796 = vcmask 523264
  %v798 = vsel %vm796, %v770, 0
  %v801 = vsel %vm796, %v771, 0
  %803 = vmatpush.bf16.msra.mxu0 0
  %804 = vmatpush.bf16.msra.mxu0 0
  %805 = vmatpush.bf16.msra.mxu0 0
  %806 = vmatpush.bf16.msra.mxu0 0
  %807 = vmatpush.bf16.msra.mxu0 %v791
  %808 = vmatpush.bf16.msra.mxu0 %v790
  %809 = vmatpush.bf16.msra.mxu0 %v789
  %810 = vmatpush.bf16.msra.mxu0 %v788
  %811 = vmatmul.bf16.gmra.mxu0 %v798
  %v812 = vpop.f32.mrf.mxu0
  %v813 = vadd.f32 0.0, %v812
  %v814 = vpop.f32.mrf.mxu0
  %v815 = vadd.f32 0.0, %v814
  %816 = vmatmul.bf16.gmra.mxu0 %v801
  %v817 = vpop.f32.mrf.mxu0
  %v818 = vadd.f32 0.0, %v817
  %v819 = vpop.f32.mrf.mxu0
  %v820 = vadd.f32 0.0, %v819
  %821 = vdwg.mxu0
  %v826 = vunpack.c.l.b16 %v654
  %v827 = vunpack.c.l.b16 %v655
  %v828 = vunpack.c.l.b16 %v656
  %v829 = vunpack.c.l.b16 %v657
  %v830 = vpack.c.b16 %v827, %v826
  %v831 = vpack.c.b16 %v829, %v828
  %v840 = vunpack.c.l.b16 %v718
  %v841 = vunpack.c.l.b16 %v719
  %v842 = vunpack.c.l.b16 %v720
  %v843 = vunpack.c.l.b16 %v721
  %v844 = vunpack.c.l.b16 %v722
  %v845 = vunpack.c.l.b16 %v723
  %v846 = vunpack.c.l.b16 %v724
  %v847 = vunpack.c.l.b16 %v725
  %v848 = vpack.c.b16 %v841, %v840
  %v849 = vpack.c.b16 %v843, %v842
  %v850 = vpack.c.b16 %v845, %v844
  %v851 = vpack.c.b16 %v847, %v846
  %v857 = vsel %vm796, %v830, 0
  %v860 = vsel %vm796, %v831, 0
  %862 = vmatpush.bf16.msra.mxu0 0
  %863 = vmatpush.bf16.msra.mxu0 0
  %864 = vmatpush.bf16.msra.mxu0 0
  %865 = vmatpush.bf16.msra.mxu0 0
  %866 = vmatpush.bf16.msra.mxu0 %v851
  %867 = vmatpush.bf16.msra.mxu0 %v850
  %868 = vmatpush.bf16.msra.mxu0 %v849
  %869 = vmatpush.bf16.msra.mxu0 %v848
  %870 = vmatmul.bf16.gmra.mxu0 %v857
  %v871 = vpop.f32.mrf.mxu0
  %v872 = vadd.f32 %v813, %v871
  %v873 = vpop.f32.mrf.mxu0
  %v874 = vadd.f32 %v815, %v873
  %875 = vmatmul.bf16.gmra.mxu0 %v860
  %v876 = vpop.f32.mrf.mxu0
  %v877 = vadd.f32 %v818, %v876
  %v878 = vpop.f32.mrf.mxu0
  %v879 = vadd.f32 %v820, %v878
  %880 = vdwg.mxu0
  %s881 = scalar_lea.vmem %s4, 160
  %v882 = vld [vmem:[%s881] sm:$0xf]
  %v883 = vld [vmem:[%s881 + $0x4] sm:$0xf]
  %v884 = vld [vmem:[%s881 + $0x8] sm:$0xf]
  %v885 = vld [vmem:[%s881 + $0xc] sm:$0xf]
  %v886 = vld [vmem:[%s881 + $0x10] sm:$0xf]
  %v887 = vld [vmem:[%s881 + $0x14] sm:$0xf]
  %v888 = vld [vmem:[%s881 + $0x18] sm:$0xf]
  %v889 = vld [vmem:[%s881 + $0x1c] sm:$0xf]
  %v894 = vunpack.c.l.b16 %v674
  %v895 = vunpack.c.l.b16 %v675
  %v896 = vunpack.c.l.b16 %v676
  %v897 = vunpack.c.l.b16 %v677
  %v898 = vpack.c.b16 %v895, %v894
  %v899 = vpack.c.b16 %v897, %v896
  %v908 = vunpack.c.l.b16 %v882
  %v909 = vunpack.c.l.b16 %v883
  %v910 = vunpack.c.l.b16 %v884
  %v911 = vunpack.c.l.b16 %v885
  %v912 = vunpack.c.l.b16 %v886
  %v913 = vunpack.c.l.b16 %v887
  %v914 = vunpack.c.l.b16 %v888
  %v915 = vunpack.c.l.b16 %v889
  %v916 = vpack.c.b16 %v909, %v908
  %v917 = vpack.c.b16 %v911, %v910
  %v918 = vpack.c.b16 %v913, %v912
  %v919 = vpack.c.b16 %v915, %v914
  %v925 = vsel %vm796, %v898, 0
  %v928 = vsel %vm796, %v899, 0
  %930 = vmatpush.bf16.msra.mxu0 0
  %931 = vmatpush.bf16.msra.mxu0 0
  %932 = vmatpush.bf16.msra.mxu0 0
  %933 = vmatpush.bf16.msra.mxu0 0
  %934 = vmatpush.bf16.msra.mxu0 %v919
  %935 = vmatpush.bf16.msra.mxu0 %v918
  %936 = vmatpush.bf16.msra.mxu0 %v917
  %937 = vmatpush.bf16.msra.mxu0 %v916
  %938 = vmatmul.bf16.gmra.mxu0 %v925
  %v939 = vpop.f32.mrf.mxu0
  %v940 = vadd.f32 0.0, %v939
  %v941 = vpop.f32.mrf.mxu0
  %v942 = vadd.f32 0.0, %v941
  %943 = vmatmul.bf16.gmra.mxu0 %v928
  %v944 = vpop.f32.mrf.mxu0
  %v945 = vadd.f32 0.0, %v944
  %v946 = vpop.f32.mrf.mxu0
  %v947 = vadd.f32 0.0, %v946
  %948 = vdwg.mxu0
  %v953 = vunpack.c.l.b16 %v658
  %v954 = vunpack.c.l.b16 %v659
  %v955 = vunpack.c.l.b16 %v660
  %v956 = vunpack.c.l.b16 %v661
  %v957 = vpack.c.b16 %v954, %v953
  %v958 = vpack.c.b16 %v956, %v955
  %v967 = vunpack.c.l.b16 %v727
  %v968 = vunpack.c.l.b16 %v728
  %v969 = vunpack.c.l.b16 %v729
  %v970 = vunpack.c.l.b16 %v730
  %v971 = vunpack.c.l.b16 %v731
  %v972 = vunpack.c.l.b16 %v732
  %v973 = vunpack.c.l.b16 %v733
  %v974 = vunpack.c.l.b16 %v734
  %v975 = vpack.c.b16 %v968, %v967
  %v976 = vpack.c.b16 %v970, %v969
  %v977 = vpack.c.b16 %v972, %v971
  %v978 = vpack.c.b16 %v974, %v973
  %v984 = vsel %vm796, %v957, 0
  %v987 = vsel %vm796, %v958, 0
  %989 = vmatpush.bf16.msra.mxu0 0
  %990 = vmatpush.bf16.msra.mxu0 0
  %991 = vmatpush.bf16.msra.mxu0 0
  %992 = vmatpush.bf16.msra.mxu0 0
  %993 = vmatpush.bf16.msra.mxu0 %v978
  %994 = vmatpush.bf16.msra.mxu0 %v977
  %995 = vmatpush.bf16.msra.mxu0 %v976
  %996 = vmatpush.bf16.msra.mxu0 %v975
  %997 = vmatmul.bf16.gmra.mxu0 %v984
  %v998 = vpop.f32.mrf.mxu0
  %v999 = vadd.f32 %v940, %v998
  %v1000 = vpop.f32.mrf.mxu0
  %v1001 = vadd.f32 %v942, %v1000
  %1002 = vmatmul.bf16.gmra.mxu0 %v987
  %v1003 = vpop.f32.mrf.mxu0
  %v1004 = vadd.f32 %v945, %v1003
  %v1005 = vpop.f32.mrf.mxu0
  %v1006 = vadd.f32 %v947, %v1005
  %1007 = vdwg.mxu0
  %s1008 = scalar_lea.vmem %s4, 192
  %v1009 = vld [vmem:[%s1008] sm:$0xf]
  %v1010 = vld [vmem:[%s1008 + $0x4] sm:$0xf]
  %v1011 = vld [vmem:[%s1008 + $0x8] sm:$0xf]
  %v1012 = vld [vmem:[%s1008 + $0xc] sm:$0xf]
  %v1013 = vld [vmem:[%s1008 + $0x10] sm:$0xf]
  %v1014 = vld [vmem:[%s1008 + $0x14] sm:$0xf]
  %v1015 = vld [vmem:[%s1008 + $0x18] sm:$0xf]
  %v1016 = vld [vmem:[%s1008 + $0x1c] sm:$0xf]
  %v1021 = vunpack.c.l.b16 %v678
  %v1022 = vunpack.c.l.b16 %v679
  %v1023 = vunpack.c.l.b16 %v680
  %v1024 = vunpack.c.l.b16 %v681
  %v1025 = vpack.c.b16 %v1022, %v1021
  %v1026 = vpack.c.b16 %v1024, %v1023
  %v1035 = vunpack.c.l.b16 %v1009
  %v1036 = vunpack.c.l.b16 %v1010
  %v1037 = vunpack.c.l.b16 %v1011
  %v1038 = vunpack.c.l.b16 %v1012
  %v1039 = vunpack.c.l.b16 %v1013
  %v1040 = vunpack.c.l.b16 %v1014
  %v1041 = vunpack.c.l.b16 %v1015
  %v1042 = vunpack.c.l.b16 %v1016
  %v1043 = vpack.c.b16 %v1036, %v1035
  %v1044 = vpack.c.b16 %v1038, %v1037
  %v1045 = vpack.c.b16 %v1040, %v1039
  %v1046 = vpack.c.b16 %v1042, %v1041
  %v1052 = vsel %vm796, %v1025, 0
  %v1055 = vsel %vm796, %v1026, 0
  %1057 = vmatpush.bf16.msra.mxu0 0
  %1058 = vmatpush.bf16.msra.mxu0 0
  %1059 = vmatpush.bf16.msra.mxu0 0
  %1060 = vmatpush.bf16.msra.mxu0 0
  %1061 = vmatpush.bf16.msra.mxu0 %v1046
  %1062 = vmatpush.bf16.msra.mxu0 %v1045
  %1063 = vmatpush.bf16.msra.mxu0 %v1044
  %1064 = vmatpush.bf16.msra.mxu0 %v1043
  %1065 = vmatmul.bf16.gmra.mxu0 %v1052
  %v1066 = vpop.f32.mrf.mxu0
  %v1067 = vadd.f32 0.0, %v1066
  %v1068 = vpop.f32.mrf.mxu0
  %v1069 = vadd.f32 0.0, %v1068
  %1070 = vmatmul.bf16.gmra.mxu0 %v1055
  %v1071 = vpop.f32.mrf.mxu0
  %v1072 = vadd.f32 0.0, %v1071
  %v1073 = vpop.f32.mrf.mxu0
  %v1074 = vadd.f32 0.0, %v1073
  %1075 = vdwg.mxu0
  %v1080 = vunpack.c.l.b16 %v662
  %v1081 = vunpack.c.l.b16 %v663
  %v1082 = vunpack.c.l.b16 %v664
  %v1083 = vunpack.c.l.b16 %v665
  %v1084 = vpack.c.b16 %v1081, %v1080
  %v1085 = vpack.c.b16 %v1083, %v1082
  %v1094 = vunpack.c.l.b16 %v736
  %v1095 = vunpack.c.l.b16 %v737
  %v1096 = vunpack.c.l.b16 %v738
  %v1097 = vunpack.c.l.b16 %v739
  %v1098 = vunpack.c.l.b16 %v740
  %v1099 = vunpack.c.l.b16 %v741
  %v1100 = vunpack.c.l.b16 %v742
  %v1101 = vunpack.c.l.b16 %v743
  %v1102 = vpack.c.b16 %v1095, %v1094
  %v1103 = vpack.c.b16 %v1097, %v1096
  %v1104 = vpack.c.b16 %v1099, %v1098
  %v1105 = vpack.c.b16 %v1101, %v1100
  %v1111 = vsel %vm796, %v1084, 0
  %v1114 = vsel %vm796, %v1085, 0
  %1116 = vmatpush.bf16.msra.mxu0 0
  %1117 = vmatpush.bf16.msra.mxu0 0
  %1118 = vmatpush.bf16.msra.mxu0 0
  %1119 = vmatpush.bf16.msra.mxu0 0
  %1120 = vmatpush.bf16.msra.mxu0 %v1105
  %1121 = vmatpush.bf16.msra.mxu0 %v1104
  %1122 = vmatpush.bf16.msra.mxu0 %v1103
  %1123 = vmatpush.bf16.msra.mxu0 %v1102
  %1124 = vmatmul.bf16.gmra.mxu0 %v1111
  %v1125 = vpop.f32.mrf.mxu0
  %v1126 = vadd.f32 %v1067, %v1125
  %v1127 = vpop.f32.mrf.mxu0
  %v1128 = vadd.f32 %v1069, %v1127
  %1129 = vmatmul.bf16.gmra.mxu0 %v1114
  %v1130 = vpop.f32.mrf.mxu0
  %v1131 = vadd.f32 %v1072, %v1130
  %v1132 = vpop.f32.mrf.mxu0
  %v1133 = vadd.f32 %v1074, %v1132
  %1134 = vdwg.mxu0
  %s1135 = scalar_lea.vmem %s4, 224
  %v1136 = vld [vmem:[%s1135] sm:$0xf]
  %v1137 = vld [vmem:[%s1135 + $0x4] sm:$0xf]
  %v1138 = vld [vmem:[%s1135 + $0x8] sm:$0xf]
  %v1139 = vld [vmem:[%s1135 + $0xc] sm:$0xf]
  %v1140 = vld [vmem:[%s1135 + $0x10] sm:$0xf]
  %v1141 = vld [vmem:[%s1135 + $0x14] sm:$0xf]
  %v1142 = vld [vmem:[%s1135 + $0x18] sm:$0xf]
  %v1143 = vld [vmem:[%s1135 + $0x1c] sm:$0xf]
  %v1148 = vunpack.c.l.b16 %v682
  %v1149 = vunpack.c.l.b16 %v683
  %v1150 = vunpack.c.l.b16 %v684
  %v1151 = vunpack.c.l.b16 %v685
  %v1152 = vpack.c.b16 %v1149, %v1148
  %v1153 = vpack.c.b16 %v1151, %v1150
  %v1162 = vunpack.c.l.b16 %v1136
  %v1163 = vunpack.c.l.b16 %v1137
  %v1164 = vunpack.c.l.b16 %v1138
  %v1165 = vunpack.c.l.b16 %v1139
  %v1166 = vunpack.c.l.b16 %v1140
  %v1167 = vunpack.c.l.b16 %v1141
  %v1168 = vunpack.c.l.b16 %v1142
  %v1169 = vunpack.c.l.b16 %v1143
  %v1170 = vpack.c.b16 %v1163, %v1162
  %v1171 = vpack.c.b16 %v1165, %v1164
  %v1172 = vpack.c.b16 %v1167, %v1166
  %v1173 = vpack.c.b16 %v1169, %v1168
  %v1179 = vsel %vm796, %v1152, 0
  %v1182 = vsel %vm796, %v1153, 0
  %1184 = vmatpush.bf16.msra.mxu0 0
  %1185 = vmatpush.bf16.msra.mxu0 0
  %1186 = vmatpush.bf16.msra.mxu0 0
  %1187 = vmatpush.bf16.msra.mxu0 0
  %1188 = vmatpush.bf16.msra.mxu0 %v1173
  %1189 = vmatpush.bf16.msra.mxu0 %v1172
  %1190 = vmatpush.bf16.msra.mxu0 %v1171
  %1191 = vmatpush.bf16.msra.mxu0 %v1170
  %1192 = vmatmul.bf16.gmra.mxu0 %v1179
  %v1193 = vpop.f32.mrf.mxu0
  %v1194 = vadd.f32 0.0, %v1193
  %v1195 = vpop.f32.mrf.mxu0
  %v1196 = vadd.f32 0.0, %v1195
  %1197 = vmatmul.bf16.gmra.mxu0 %v1182
  %v1198 = vpop.f32.mrf.mxu0
  %v1199 = vadd.f32 0.0, %v1198
  %v1200 = vpop.f32.mrf.mxu0
  %v1201 = vadd.f32 0.0, %v1200
  %1202 = vdwg.mxu0
  %v1207 = vunpack.c.l.b16 %v666
  %v1208 = vunpack.c.l.b16 %v667
  %v1209 = vunpack.c.l.b16 %v668
  %v1210 = vunpack.c.l.b16 %v669
  %v1211 = vpack.c.b16 %v1208, %v1207
  %v1212 = vpack.c.b16 %v1210, %v1209
  %v1221 = vunpack.c.l.b16 %v745
  %v1222 = vunpack.c.l.b16 %v746
  %v1223 = vunpack.c.l.b16 %v747
  %v1224 = vunpack.c.l.b16 %v748
  %v1225 = vunpack.c.l.b16 %v749
  %v1226 = vunpack.c.l.b16 %v750
  %v1227 = vunpack.c.l.b16 %v751
  %v1228 = vunpack.c.l.b16 %v752
  %v1229 = vpack.c.b16 %v1222, %v1221
  %v1230 = vpack.c.b16 %v1224, %v1223
  %v1231 = vpack.c.b16 %v1226, %v1225
  %v1232 = vpack.c.b16 %v1228, %v1227
  %v1238 = vsel %vm796, %v1211, 0
  %v1241 = vsel %vm796, %v1212, 0
  %1243 = vmatpush.bf16.msra.mxu0 0
  %1244 = vmatpush.bf16.msra.mxu0 0
  %1245 = vmatpush.bf16.msra.mxu0 0
  %1246 = vmatpush.bf16.msra.mxu0 0
  %1247 = vmatpush.bf16.msra.mxu0 %v1232
  %1248 = vmatpush.bf16.msra.mxu0 %v1231
  %1249 = vmatpush.bf16.msra.mxu0 %v1230
  %1250 = vmatpush.bf16.msra.mxu0 %v1229
  %1251 = vmatmul.bf16.gmra.mxu0 %v1238
  %v1252 = vpop.f32.mrf.mxu0
  %v1253 = vadd.f32 %v1194, %v1252
  %v1254 = vpop.f32.mrf.mxu0
  %v1255 = vadd.f32 %v1196, %v1254
  %1256 = vmatmul.bf16.gmra.mxu0 %v1241
  %v1257 = vpop.f32.mrf.mxu0
  %v1258 = vadd.f32 %v1199, %v1257
  %v1259 = vpop.f32.mrf.mxu0
  %v1260 = vadd.f32 %v1201, %v1259
  %1261 = vdwg.mxu0
  %s1262 = scalar_lea.vmem %s4, 256
  %v1263 = vld [vmem:[%s1262] sm:$0xf]
  %v1264 = vld [vmem:[%s1262 + $0x4] sm:$0xf]
  %v1265 = vld [vmem:[%s1262 + $0x8] sm:$0xf]
  %v1266 = vld [vmem:[%s1262 + $0xc] sm:$0xf]
  %v1267 = vld [vmem:[%s1262 + $0x10] sm:$0xf]
  %v1268 = vld [vmem:[%s1262 + $0x14] sm:$0xf]
  %v1269 = vld [vmem:[%s1262 + $0x18] sm:$0xf]
  %v1270 = vld [vmem:[%s1262 + $0x1c] sm:$0xf]
  %v1275 = vunpack.c.l.b16 %v686
  %v1276 = vunpack.c.l.b16 %v687
  %v1277 = vunpack.c.l.b16 %v688
  %v1278 = vunpack.c.l.b16 %v689
  %v1279 = vpack.c.b16 %v1276, %v1275
  %v1280 = vpack.c.b16 %v1278, %v1277
  %v1289 = vunpack.c.l.b16 %v1263
  %v1290 = vunpack.c.l.b16 %v1264
  %v1291 = vunpack.c.l.b16 %v1265
  %v1292 = vunpack.c.l.b16 %v1266
  %v1293 = vunpack.c.l.b16 %v1267
  %v1294 = vunpack.c.l.b16 %v1268
  %v1295 = vunpack.c.l.b16 %v1269
  %v1296 = vunpack.c.l.b16 %v1270
  %v1297 = vpack.c.b16 %v1290, %v1289
  %v1298 = vpack.c.b16 %v1292, %v1291
  %v1299 = vpack.c.b16 %v1294, %v1293
  %v1300 = vpack.c.b16 %v1296, %v1295
  %v1306 = vsel %vm796, %v1279, 0
  %v1309 = vsel %vm796, %v1280, 0
  %1311 = vmatpush.bf16.msra.mxu0 0
  %1312 = vmatpush.bf16.msra.mxu0 0
  %1313 = vmatpush.bf16.msra.mxu0 0
  %1314 = vmatpush.bf16.msra.mxu0 0
  %1315 = vmatpush.bf16.msra.mxu0 %v1300
  %1316 = vmatpush.bf16.msra.mxu0 %v1299
  %1317 = vmatpush.bf16.msra.mxu0 %v1298
  %1318 = vmatpush.bf16.msra.mxu0 %v1297
  %1319 = vmatmul.bf16.gmra.mxu0 %v1306
  %v1320 = vpop.f32.mrf.mxu0
  %v1321 = vadd.f32 0.0, %v1320
  %v1322 = vpop.f32.mrf.mxu0
  %v1323 = vadd.f32 0.0, %v1322
  %1324 = vmatmul.bf16.gmra.mxu0 %v1309
  %v1325 = vpop.f32.mrf.mxu0
  %v1326 = vadd.f32 0.0, %v1325
  %v1327 = vpop.f32.mrf.mxu0
  %v1328 = vadd.f32 0.0, %v1327
  %1329 = vdwg.mxu0
  %v1330 = vadd.f32 %v872, %v1321
  %v1331 = vadd.f32 %v874, %v1323
  %v1332 = vadd.f32 %v877, %v1326
  %v1333 = vadd.f32 %v879, %v1328
  %s1334 = scalar_lea.vmem %s4, 288
  %v1335 = vld [vmem:[%s1334] sm:$0xf]
  %v1336 = vld [vmem:[%s1334 + $0x4] sm:$0xf]
  %v1337 = vld [vmem:[%s1334 + $0x8] sm:$0xf]
  %v1338 = vld [vmem:[%s1334 + $0xc] sm:$0xf]
  %v1339 = vld [vmem:[%s1334 + $0x10] sm:$0xf]
  %v1340 = vld [vmem:[%s1334 + $0x14] sm:$0xf]
  %v1341 = vld [vmem:[%s1334 + $0x18] sm:$0xf]
  %v1342 = vld [vmem:[%s1334 + $0x1c] sm:$0xf]
  %v1347 = vunpack.c.l.b16 %v690
  %v1348 = vunpack.c.l.b16 %v691
  %v1349 = vunpack.c.l.b16 %v692
  %v1350 = vunpack.c.l.b16 %v693
  %v1351 = vpack.c.b16 %v1348, %v1347
  %v1352 = vpack.c.b16 %v1350, %v1349
  %v1361 = vunpack.c.l.b16 %v1335
  %v1362 = vunpack.c.l.b16 %v1336
  %v1363 = vunpack.c.l.b16 %v1337
  %v1364 = vunpack.c.l.b16 %v1338
  %v1365 = vunpack.c.l.b16 %v1339
  %v1366 = vunpack.c.l.b16 %v1340
  %v1367 = vunpack.c.l.b16 %v1341
  %v1368 = vunpack.c.l.b16 %v1342
  %v1369 = vpack.c.b16 %v1362, %v1361
  %v1370 = vpack.c.b16 %v1364, %v1363
  %v1371 = vpack.c.b16 %v1366, %v1365
  %v1372 = vpack.c.b16 %v1368, %v1367
  %v1378 = vsel %vm796, %v1351, 0
  %v1381 = vsel %vm796, %v1352, 0
  %1383 = vmatpush.bf16.msra.mxu0 0
  %1384 = vmatpush.bf16.msra.mxu0 0
  %1385 = vmatpush.bf16.msra.mxu0 0
  %1386 = vmatpush.bf16.msra.mxu0 0
  %1387 = vmatpush.bf16.msra.mxu0 %v1372
  %1388 = vmatpush.bf16.msra.mxu0 %v1371
  %1389 = vmatpush.bf16.msra.mxu0 %v1370
  %1390 = vmatpush.bf16.msra.mxu0 %v1369
  %1391 = vmatmul.bf16.gmra.mxu0 %v1378
  %v1392 = vpop.f32.mrf.mxu0
  %v1393 = vadd.f32 0.0, %v1392
  %v1394 = vpop.f32.mrf.mxu0
  %v1395 = vadd.f32 0.0, %v1394
  %1396 = vmatmul.bf16.gmra.mxu0 %v1381
  %v1397 = vpop.f32.mrf.mxu0
  %v1398 = vadd.f32 0.0, %v1397
  %v1399 = vpop.f32.mrf.mxu0
  %v1400 = vadd.f32 0.0, %v1399
  %1401 = vdwg.mxu0
  %v1402 = vadd.f32 %v999, %v1393
  %v1403 = vadd.f32 %v1001, %v1395
  %v1404 = vadd.f32 %v1004, %v1398
  %v1405 = vadd.f32 %v1006, %v1400
  %s1406 = scalar_lea.vmem %s4, 320
  %v1407 = vld [vmem:[%s1406] sm:$0xf]
  %v1408 = vld [vmem:[%s1406 + $0x4] sm:$0xf]
  %v1409 = vld [vmem:[%s1406 + $0x8] sm:$0xf]
  %v1410 = vld [vmem:[%s1406 + $0xc] sm:$0xf]
  %v1411 = vld [vmem:[%s1406 + $0x10] sm:$0xf]
  %v1412 = vld [vmem:[%s1406 + $0x14] sm:$0xf]
  %v1413 = vld [vmem:[%s1406 + $0x18] sm:$0xf]
  %v1414 = vld [vmem:[%s1406 + $0x1c] sm:$0xf]
  %v1419 = vunpack.c.l.b16 %v694
  %v1420 = vunpack.c.l.b16 %v695
  %v1421 = vunpack.c.l.b16 %v696
  %v1422 = vunpack.c.l.b16 %v697
  %v1423 = vpack.c.b16 %v1420, %v1419
  %v1424 = vpack.c.b16 %v1422, %v1421
  %v1433 = vunpack.c.l.b16 %v1407
  %v1434 = vunpack.c.l.b16 %v1408
  %v1435 = vunpack.c.l.b16 %v1409
  %v1436 = vunpack.c.l.b16 %v1410
  %v1437 = vunpack.c.l.b16 %v1411
  %v1438 = vunpack.c.l.b16 %v1412
  %v1439 = vunpack.c.l.b16 %v1413
  %v1440 = vunpack.c.l.b16 %v1414
  %v1441 = vpack.c.b16 %v1434, %v1433
  %v1442 = vpack.c.b16 %v1436, %v1435
  %v1443 = vpack.c.b16 %v1438, %v1437
  %v1444 = vpack.c.b16 %v1440, %v1439
  %v1450 = vsel %vm796, %v1423, 0
  %v1453 = vsel %vm796, %v1424, 0
  %1455 = vmatpush.bf16.msra.mxu0 0
  %1456 = vmatpush.bf16.msra.mxu0 0
  %1457 = vmatpush.bf16.msra.mxu0 0
  %1458 = vmatpush.bf16.msra.mxu0 0
  %1459 = vmatpush.bf16.msra.mxu0 %v1444
  %1460 = vmatpush.bf16.msra.mxu0 %v1443
  %1461 = vmatpush.bf16.msra.mxu0 %v1442
  %1462 = vmatpush.bf16.msra.mxu0 %v1441
  %1463 = vmatmul.bf16.gmra.mxu0 %v1450
  %v1464 = vpop.f32.mrf.mxu0
  %v1465 = vadd.f32 0.0, %v1464
  %v1466 = vpop.f32.mrf.mxu0
  %v1467 = vadd.f32 0.0, %v1466
  %1468 = vmatmul.bf16.gmra.mxu0 %v1453
  %v1469 = vpop.f32.mrf.mxu0
  %v1470 = vadd.f32 0.0, %v1469
  %v1471 = vpop.f32.mrf.mxu0
  %v1472 = vadd.f32 0.0, %v1471
  %1473 = vdwg.mxu0
  %v1474 = vadd.f32 %v1126, %v1465
  %v1475 = vadd.f32 %v1128, %v1467
  %v1476 = vadd.f32 %v1131, %v1470
  %v1477 = vadd.f32 %v1133, %v1472
  %s1478 = scalar_lea.vmem %s4, 352
  %v1479 = vld [vmem:[%s1478] sm:$0xf]
  %v1480 = vld [vmem:[%s1478 + $0x4] sm:$0xf]
  %v1481 = vld [vmem:[%s1478 + $0x8] sm:$0xf]
  %v1482 = vld [vmem:[%s1478 + $0xc] sm:$0xf]
  %v1483 = vld [vmem:[%s1478 + $0x10] sm:$0xf]
  %v1484 = vld [vmem:[%s1478 + $0x14] sm:$0xf]
  %v1485 = vld [vmem:[%s1478 + $0x18] sm:$0xf]
  %v1486 = vld [vmem:[%s1478 + $0x1c] sm:$0xf]
  %v1491 = vunpack.c.l.b16 %v698
  %v1492 = vunpack.c.l.b16 %v699
  %v1493 = vunpack.c.l.b16 %v700
  %v1494 = vunpack.c.l.b16 %v701
  %v1495 = vpack.c.b16 %v1492, %v1491
  %v1496 = vpack.c.b16 %v1494, %v1493
  %v1505 = vunpack.c.l.b16 %v1479
  %v1506 = vunpack.c.l.b16 %v1480
  %v1507 = vunpack.c.l.b16 %v1481
  %v1508 = vunpack.c.l.b16 %v1482
  %v1509 = vunpack.c.l.b16 %v1483
  %v1510 = vunpack.c.l.b16 %v1484
  %v1511 = vunpack.c.l.b16 %v1485
  %v1512 = vunpack.c.l.b16 %v1486
  %v1513 = vpack.c.b16 %v1506, %v1505
  %v1514 = vpack.c.b16 %v1508, %v1507
  %v1515 = vpack.c.b16 %v1510, %v1509
  %v1516 = vpack.c.b16 %v1512, %v1511
  %v1522 = vsel %vm796, %v1495, 0
  %v1525 = vsel %vm796, %v1496, 0
  %1527 = vmatpush.bf16.msra.mxu0 0
  %1528 = vmatpush.bf16.msra.mxu0 0
  %1529 = vmatpush.bf16.msra.mxu0 0
  %1530 = vmatpush.bf16.msra.mxu0 0
  %1531 = vmatpush.bf16.msra.mxu0 %v1516
  %1532 = vmatpush.bf16.msra.mxu0 %v1515
  %1533 = vmatpush.bf16.msra.mxu0 %v1514
  %1534 = vmatpush.bf16.msra.mxu0 %v1513
  %1535 = vmatmul.bf16.gmra.mxu0 %v1522
  %v1536 = vpop.f32.mrf.mxu0
  %v1537 = vadd.f32 0.0, %v1536
  %v1538 = vpop.f32.mrf.mxu0
  %v1539 = vadd.f32 0.0, %v1538
  %1540 = vmatmul.bf16.gmra.mxu0 %v1525
  %v1541 = vpop.f32.mrf.mxu0
  %v1542 = vadd.f32 0.0, %v1541
  %v1543 = vpop.f32.mrf.mxu0
  %v1544 = vadd.f32 0.0, %v1543
  %1545 = vdwg.mxu0
  %v1546 = vadd.f32 %v1253, %v1537
  %v1547 = vadd.f32 %v1255, %v1539
  %v1548 = vadd.f32 %v1258, %v1542
  %v1549 = vadd.f32 %v1260, %v1544
  %s1550 = scalar_lea.vmem %s4, 384
  %v1551 = vld [vmem:[%s1550] sm:$0xf]
  %v1552 = vld [vmem:[%s1550 + $0x4] sm:$0xf]
  %v1553 = vld [vmem:[%s1550 + $0x8] sm:$0xf]
  %v1554 = vld [vmem:[%s1550 + $0xc] sm:$0xf]
  %v1555 = vld [vmem:[%s1550 + $0x10] sm:$0xf]
  %v1556 = vld [vmem:[%s1550 + $0x14] sm:$0xf]
  %v1557 = vld [vmem:[%s1550 + $0x18] sm:$0xf]
  %v1558 = vld [vmem:[%s1550 + $0x1c] sm:$0xf]
  %v1563 = vunpack.c.l.b16 %v702
  %v1564 = vunpack.c.l.b16 %v703
  %v1565 = vunpack.c.l.b16 %v704
  %v1566 = vunpack.c.l.b16 %v705
  %v1567 = vpack.c.b16 %v1564, %v1563
  %v1568 = vpack.c.b16 %v1566, %v1565
  %v1577 = vunpack.c.l.b16 %v1551
  %v1578 = vunpack.c.l.b16 %v1552
  %v1579 = vunpack.c.l.b16 %v1553
  %v1580 = vunpack.c.l.b16 %v1554
  %v1581 = vunpack.c.l.b16 %v1555
  %v1582 = vunpack.c.l.b16 %v1556
  %v1583 = vunpack.c.l.b16 %v1557
  %v1584 = vunpack.c.l.b16 %v1558
  %v1585 = vpack.c.b16 %v1578, %v1577
  %v1586 = vpack.c.b16 %v1580, %v1579
  %v1587 = vpack.c.b16 %v1582, %v1581
  %v1588 = vpack.c.b16 %v1584, %v1583
  %v1594 = vsel %vm796, %v1567, 0
  %v1597 = vsel %vm796, %v1568, 0
  %1599 = vmatpush.bf16.msra.mxu0 0
  %1600 = vmatpush.bf16.msra.mxu0 0
  %1601 = vmatpush.bf16.msra.mxu0 0
  %1602 = vmatpush.bf16.msra.mxu0 0
  %1603 = vmatpush.bf16.msra.mxu0 %v1588
  %1604 = vmatpush.bf16.msra.mxu0 %v1587
  %1605 = vmatpush.bf16.msra.mxu0 %v1586
  %1606 = vmatpush.bf16.msra.mxu0 %v1585
  %1607 = vmatmul.bf16.gmra.mxu0 %v1594
  %v1608 = vpop.f32.mrf.mxu0
  %v1609 = vadd.f32 0.0, %v1608
  %v1610 = vpop.f32.mrf.mxu0
  %v1611 = vadd.f32 0.0, %v1610
  %1612 = vmatmul.bf16.gmra.mxu0 %v1597
  %v1613 = vpop.f32.mrf.mxu0
  %v1614 = vadd.f32 0.0, %v1613
  %v1615 = vpop.f32.mrf.mxu0
  %v1616 = vadd.f32 0.0, %v1615
  %1617 = vdwg.mxu0
  %v1618 = vadd.f32 %v1330, %v1609
  %v1619 = vadd.f32 %v1331, %v1611
  %v1620 = vadd.f32 %v1332, %v1614
  %v1621 = vadd.f32 %v1333, %v1616
  %s1622 = scalar_lea.vmem %s4, 416
  %v1623 = vld [vmem:[%s1622] sm:$0xf]
  %v1624 = vld [vmem:[%s1622 + $0x4] sm:$0xf]
  %v1625 = vld [vmem:[%s1622 + $0x8] sm:$0xf]
  %v1626 = vld [vmem:[%s1622 + $0xc] sm:$0xf]
  %v1627 = vld [vmem:[%s1622 + $0x10] sm:$0xf]
  %v1628 = vld [vmem:[%s1622 + $0x14] sm:$0xf]
  %v1629 = vld [vmem:[%s1622 + $0x18] sm:$0xf]
  %v1630 = vld [vmem:[%s1622 + $0x1c] sm:$0xf]
  %v1635 = vunpack.c.l.b16 %v706
  %v1636 = vunpack.c.l.b16 %v707
  %v1637 = vunpack.c.l.b16 %v708
  %v1638 = vunpack.c.l.b16 %v709
  %v1639 = vpack.c.b16 %v1636, %v1635
  %v1640 = vpack.c.b16 %v1638, %v1637
  %v1649 = vunpack.c.l.b16 %v1623
  %v1650 = vunpack.c.l.b16 %v1624
  %v1651 = vunpack.c.l.b16 %v1625
  %v1652 = vunpack.c.l.b16 %v1626
  %v1653 = vunpack.c.l.b16 %v1627
  %v1654 = vunpack.c.l.b16 %v1628
  %v1655 = vunpack.c.l.b16 %v1629
  %v1656 = vunpack.c.l.b16 %v1630
  %v1657 = vpack.c.b16 %v1650, %v1649
  %v1658 = vpack.c.b16 %v1652, %v1651
  %v1659 = vpack.c.b16 %v1654, %v1653
  %v1660 = vpack.c.b16 %v1656, %v1655
  %v1666 = vsel %vm796, %v1639, 0
  %v1669 = vsel %vm796, %v1640, 0
  %1671 = vmatpush.bf16.msra.mxu0 0
  %1672 = vmatpush.bf16.msra.mxu0 0
  %1673 = vmatpush.bf16.msra.mxu0 0
  %1674 = vmatpush.bf16.msra.mxu0 0
  %1675 = vmatpush.bf16.msra.mxu0 %v1660
  %1676 = vmatpush.bf16.msra.mxu0 %v1659
  %1677 = vmatpush.bf16.msra.mxu0 %v1658
  %1678 = vmatpush.bf16.msra.mxu0 %v1657
  %1679 = vmatmul.bf16.gmra.mxu0 %v1666
  %v1680 = vpop.f32.mrf.mxu0
  %v1681 = vadd.f32 0.0, %v1680
  %v1682 = vpop.f32.mrf.mxu0
  %v1683 = vadd.f32 0.0, %v1682
  %1684 = vmatmul.bf16.gmra.mxu0 %v1669
  %v1685 = vpop.f32.mrf.mxu0
  %v1686 = vadd.f32 0.0, %v1685
  %v1687 = vpop.f32.mrf.mxu0
  %v1688 = vadd.f32 0.0, %v1687
  %1689 = vdwg.mxu0
  %v1690 = vadd.f32 %v1402, %v1681
  %v1691 = vadd.f32 %v1403, %v1683
  %v1692 = vadd.f32 %v1404, %v1686
  %v1693 = vadd.f32 %v1405, %v1688
  %s1694 = scalar_lea.vmem %s4, 448
  %v1695 = vld [vmem:[%s1694] sm:$0xf]
  %v1696 = vld [vmem:[%s1694 + $0x4] sm:$0xf]
  %v1697 = vld [vmem:[%s1694 + $0x8] sm:$0xf]
  %v1698 = vld [vmem:[%s1694 + $0xc] sm:$0xf]
  %v1699 = vld [vmem:[%s1694 + $0x10] sm:$0xf]
  %v1700 = vld [vmem:[%s1694 + $0x14] sm:$0xf]
  %v1701 = vld [vmem:[%s1694 + $0x18] sm:$0xf]
  %v1702 = vld [vmem:[%s1694 + $0x1c] sm:$0xf]
  %v1707 = vunpack.c.l.b16 %v710
  %v1708 = vunpack.c.l.b16 %v711
  %v1709 = vunpack.c.l.b16 %v712
  %v1710 = vunpack.c.l.b16 %v713
  %v1711 = vpack.c.b16 %v1708, %v1707
  %v1712 = vpack.c.b16 %v1710, %v1709
  %v1721 = vunpack.c.l.b16 %v1695
  %v1722 = vunpack.c.l.b16 %v1696
  %v1723 = vunpack.c.l.b16 %v1697
  %v1724 = vunpack.c.l.b16 %v1698
  %v1725 = vunpack.c.l.b16 %v1699
  %v1726 = vunpack.c.l.b16 %v1700
  %v1727 = vunpack.c.l.b16 %v1701
  %v1728 = vunpack.c.l.b16 %v1702
  %v1729 = vpack.c.b16 %v1722, %v1721
  %v1730 = vpack.c.b16 %v1724, %v1723
  %v1731 = vpack.c.b16 %v1726, %v1725
  %v1732 = vpack.c.b16 %v1728, %v1727
  %v1738 = vsel %vm796, %v1711, 0
  %v1741 = vsel %vm796, %v1712, 0
  %1743 = vmatpush.bf16.msra.mxu0 0
  %1744 = vmatpush.bf16.msra.mxu0 0
  %1745 = vmatpush.bf16.msra.mxu0 0
  %1746 = vmatpush.bf16.msra.mxu0 0
  %1747 = vmatpush.bf16.msra.mxu0 %v1732
  %1748 = vmatpush.bf16.msra.mxu0 %v1731
  %1749 = vmatpush.bf16.msra.mxu0 %v1730
  %1750 = vmatpush.bf16.msra.mxu0 %v1729
  %1751 = vmatmul.bf16.gmra.mxu0 %v1738
  %v1752 = vpop.f32.mrf.mxu0
  %v1753 = vadd.f32 0.0, %v1752
  %v1754 = vpop.f32.mrf.mxu0
  %v1755 = vadd.f32 0.0, %v1754
  %1756 = vmatmul.bf16.gmra.mxu0 %v1741
  %v1757 = vpop.f32.mrf.mxu0
  %v1758 = vadd.f32 0.0, %v1757
  %v1759 = vpop.f32.mrf.mxu0
  %v1760 = vadd.f32 0.0, %v1759
  %1761 = vdwg.mxu0
  %v1762 = vadd.f32 %v1474, %v1753
  %v1763 = vadd.f32 %v1475, %v1755
  %v1764 = vadd.f32 %v1476, %v1758
  %v1765 = vadd.f32 %v1477, %v1760
  %s1766 = scalar_lea.vmem %s4, 480
  %v1767 = vld [vmem:[%s1766] sm:$0xf]
  %v1768 = vld [vmem:[%s1766 + $0x4] sm:$0xf]
  %v1769 = vld [vmem:[%s1766 + $0x8] sm:$0xf]
  %v1770 = vld [vmem:[%s1766 + $0xc] sm:$0xf]
  %v1771 = vld [vmem:[%s1766 + $0x10] sm:$0xf]
  %v1772 = vld [vmem:[%s1766 + $0x14] sm:$0xf]
  %v1773 = vld [vmem:[%s1766 + $0x18] sm:$0xf]
  %v1774 = vld [vmem:[%s1766 + $0x1c] sm:$0xf]
  %v1779 = vunpack.c.l.b16 %v714
  %v1780 = vunpack.c.l.b16 %v715
  %v1781 = vunpack.c.l.b16 %v716
  %v1782 = vunpack.c.l.b16 %v717
  %v1783 = vpack.c.b16 %v1780, %v1779
  %v1784 = vpack.c.b16 %v1782, %v1781
  %v1793 = vunpack.c.l.b16 %v1767
  %v1794 = vunpack.c.l.b16 %v1768
  %v1795 = vunpack.c.l.b16 %v1769
  %v1796 = vunpack.c.l.b16 %v1770
  %v1797 = vunpack.c.l.b16 %v1771
  %v1798 = vunpack.c.l.b16 %v1772
  %v1799 = vunpack.c.l.b16 %v1773
  %v1800 = vunpack.c.l.b16 %v1774
  %v1801 = vpack.c.b16 %v1794, %v1793
  %v1802 = vpack.c.b16 %v1796, %v1795
  %v1803 = vpack.c.b16 %v1798, %v1797
  %v1804 = vpack.c.b16 %v1800, %v1799
  %v1810 = vsel %vm796, %v1783, 0
  %v1813 = vsel %vm796, %v1784, 0
  %1815 = vmatpush.bf16.msra.mxu0 0
  %1816 = vmatpush.bf16.msra.mxu0 0
  %1817 = vmatpush.bf16.msra.mxu0 0
  %1818 = vmatpush.bf16.msra.mxu0 0
  %1819 = vmatpush.bf16.msra.mxu0 %v1804
  %1820 = vmatpush.bf16.msra.mxu0 %v1803
  %1821 = vmatpush.bf16.msra.mxu0 %v1802
  %1822 = vmatpush.bf16.msra.mxu0 %v1801
  %1823 = vmatmul.bf16.gmra.mxu0 %v1810
  %v1824 = vpop.f32.mrf.mxu0
  %v1825 = vadd.f32 0.0, %v1824
  %v1826 = vpop.f32.mrf.mxu0
  %v1827 = vadd.f32 0.0, %v1826
  %1828 = vmatmul.bf16.gmra.mxu0 %v1813
  %v1829 = vpop.f32.mrf.mxu0
  %v1830 = vadd.f32 0.0, %v1829
  %v1831 = vpop.f32.mrf.mxu0
  %v1832 = vadd.f32 0.0, %v1831
  %1833 = vdwg.mxu0
  %v1834 = vadd.f32 %v1546, %v1825
  %v1835 = vadd.f32 %v1547, %v1827
  %v1836 = vadd.f32 %v1548, %v1830
  %v1837 = vadd.f32 %v1549, %v1832
  %v1838 = vadd.f32 %v1618, %v1690
  %v1839 = vadd.f32 %v1619, %v1691
  %v1840 = vadd.f32 %v1620, %v1692
  %v1841 = vadd.f32 %v1621, %v1693
  %v1842 = vadd.f32 %v1762, %v1834
  %v1843 = vadd.f32 %v1763, %v1835
  %v1844 = vadd.f32 %v1764, %v1836
  %v1845 = vadd.f32 %v1765, %v1837
  %v1846 = vadd.f32 %v1838, %v1842
  %v1847 = vadd.f32 %v1839, %v1843
  %v1848 = vadd.f32 %v1840, %v1844
  %v1849 = vadd.f32 %v1841, %v1845
  %v1850 = vld [vmem:[%s5] sm:$0x1]
  %v1852 = vperm.slane %v1850, 0
  %v1854 = vadd.f32 %v1846, %v1852
  %v1855 = vadd.f32 %v1847, %v1852
  %v1856 = vadd.f32 %v1848, %v1852
  %v1857 = vadd.f32 %v1849, %v1852
  %v1858 = vtanh.pop %v1854
  %v1859 = vtanh.pop %v1855
  %v1860 = vtanh.pop %v1856
  %v1861 = vtanh.pop %v1857
  %1862 = vst [vmem:[%s6] sm:$0xff] %v1858
  %1863 = vst [vmem:[%s6 + $0x8] sm:$0xff] %v1859
  %1864 = vst [vmem:[%s6 + $0x10] sm:$0xff] %v1860
  %1865 = vst [vmem:[%s6 + $0x18] sm:$0xff] %v1861
  // Predicated region
  $region26: #{generator_forward.1} parent=0 // pred_check
    _
  $region27: #{generator_forward.1} parent=0 // pred_check_branch
    %1867 = sbr.rel (0) target = $region29
  $region28: #{generator_forward.1} parent=0 // pred_region
    _
  $region29: #{generator_forward.1} parent=0 // pred_fallthru
    _
  // Predicated region
  $region30: #{generator_forward.1} parent=0 // pred_check
    _
  $region31: #{generator_forward.1} parent=0 // pred_check_branch
    %1869 = sbr.rel (0) target = $region33
  $region32: #{generator_forward.1} parent=0 // pred_region
    _
  $region33: #{generator_forward.1} parent=0 // pred_fallthru
    _

</llo_original>
